<compile_context>
chip_gen: v5e
topology: v5e:2x2
jax: 0.10.0
libtpu: 0.0.40
codegen_flags: <defaults>
</compile_context>

<pallas_src>
from functools import partial

import jax
import jax.numpy as jnp
from jax.experimental import pallas as pl
from jax.experimental.pallas import tpu as pltpu

# ----------------------------- configuration --------------------------------
HID_DIM = 32
N_HEADS = 4
HEAD_DIM = HID_DIM // N_HEADS
PF_DIM = 64
EPS = 1e-5
NEG_INF = -1e10
LANES = 128
MXU_DTYPE = jnp.bfloat16   # MXU-input dtype (f32 accumulate); LN/softmax stay f32

# weight-slab row offsets (sublane axis; lanes padded to 128)
ROW_QKV0 = 0                     # [H, 3H]  fused Q|K|V, self-attention
ROW_QKV1 = ROW_QKV0 + HID_DIM    # [H, 3H]  Q | fused K|V, cross-attention
ROW_O0 = ROW_QKV1 + HID_DIM      # [H, H]   W_O, self-attention
ROW_O1 = ROW_O0 + HID_DIM        # [H, H]   W_O, cross-attention
ROW_FF1 = ROW_O1 + HID_DIM       # [H, PF]
ROW_FF2 = ROW_FF1 + HID_DIM      # [PF, H]
W_ROWS = ROW_FF2 + PF_DIM        # 224

# bias / LayerNorm slab rows
VROW_BQKV0, VROW_BQKV1 = 0, 1
VROW_BO0, VROW_BO1 = 2, 3
VROW_B1, VROW_B2 = 4, 5
VROW_LNG, VROW_LNB = 6, 9
VEC_ROWS = 16


# ------------------------------ Pallas kernel -------------------------------
def decoder_layer_kernel(trg_ref, enc_ref, tmask_ref, smask_ref, w_ref, vec_ref,
                         out_ref, attn_ref):
    bb, T, H = trg_ref.shape
    Sp = enc_ref.shape[1]
    S_out = attn_ref.shape[-1]
    mxu = w_ref.dtype
    inv_scale = 1.0 / (float(HEAD_DIM) ** 0.5)

    def mm(x, r0, rows, c0, cols):
        """[N, rows] (f32) x weight-slab block [rows, cols] -> [N, cols] f32 (MXU bf16)."""
        w = w_ref[r0:r0 + rows, c0:c0 + cols]
        return jnp.dot(x.astype(mxu), w, preferred_element_type=jnp.float32)

    def vrow(r, c0, cols):
        return vec_ref[r:r + 1, c0:c0 + cols]           # [1, cols] f32, broadcasts

    def layer_norm(v, idx):
        mu = jnp.mean(v, axis=-1, keepdims=True)
        var = jnp.mean((v - mu) ** 2, axis=-1, keepdims=True)
        return ((v - mu) * jax.lax.rsqrt(var + EPS) * vrow(VROW_LNG + idx, 0, H)
                + vrow(VROW_LNB + idx, 0, H))

    def attention(q_f, kv_f, Tq, Tk, bias, want_probs):
        # q_f: [bb*Tq, H]; kv_f: [bb*Tk, 2H] with K|V on the lane axis.  Heads are the
        # HEAD_DIM-wide lane chunks; scores / context are batched over bb via einsum.
        q3 = q_f.reshape(bb, Tq, H)
        kv3 = kv_f.reshape(bb, Tk, 2 * H)
        ctx, probs = [], []
        for h in range(N_HEADS):                        # NH=4: tiny static unroll
            lo = h * HEAD_DIM
            q_h = q3[:, :, lo:lo + HEAD_DIM].astype(mxu)
            k_h = kv3[:, :, lo:lo + HEAD_DIM].astype(mxu)
            v_h = kv3[:, :, H + lo:H + lo + HEAD_DIM].astype(mxu)
            e = jnp.einsum("bqd,bkd->bqk", q_h, k_h,
                           preferred_element_type=jnp.float32) * inv_scale + bias
            m = jnp.max(e, axis=-1, keepdims=True)
            p = jnp.exp(e - m)
            # exact normalization: the probabilities are a kernel output
            a = p * (1.0 / jnp.sum(p, axis=-1, keepdims=True))
            ctx.append(jnp.einsum("bqk,bkd->bqd", a.astype(mxu), v_h,
                                  preferred_element_type=jnp.float32))
            if want_probs:
                probs.append(a[:, None])
        ctx_f = jnp.concatenate(ctx, axis=-1).reshape(bb * Tq, H)
        a_all = jnp.concatenate(probs, axis=1) if want_probs else None
        return ctx_f, a_all

    x = trg_ref[...].reshape(bb * T, H)                 # f32 residual stream
    enc = enc_ref[...].reshape(bb * Sp, H)

    # masks -> additive biases, once per attention call (broadcast over heads)
    tbias = jnp.where(tmask_ref[...] == 0.0, NEG_INF, 0.0)     # [bb, tq, T]
    sbias = jnp.where(smask_ref[...] == 0.0, NEG_INF, 0.0)     # [bb, sq, Sp]

    # ---- self-attention: one fused [bb*T,H] x [H,3H] QKV matmul -----------------
    qkv = mm(x, ROW_QKV0, H, 0, 3 * H) + vrow(VROW_BQKV0, 0, 3 * H)
    ctx, _ = attention(qkv[:, 0:H], qkv[:, H:3 * H], T, T, tbias, want_probs=False)
    sa = mm(ctx, ROW_O0, H, 0, H) + vrow(VROW_BO0, 0, H)        # full-width W_O
    x = layer_norm(x + sa, 0)

    # ---- cross-attention: Q from x, fused K|V from the encoder output -----------
    q_f = mm(x, ROW_QKV1, H, 0, H) + vrow(VROW_BQKV1, 0, H)
    kv_f = mm(enc, ROW_QKV1, H, H, 2 * H) + vrow(VROW_BQKV1, H, 2 * H)
    ctx, probs = attention(q_f, kv_f, T, Sp, sbias, want_probs=True)
    ea = mm(ctx, ROW_O1, H, 0, H) + vrow(VROW_BO1, 0, H)
    x = layer_norm(x + ea, 1)

    # lane-dense attention-probability store: pad keys (exact zeros) to 128 lanes
    if S_out > Sp:
        probs = jnp.concatenate(
            [probs, jnp.zeros((bb, N_HEADS, T, S_out - Sp), jnp.float32)], axis=-1)
    attn_ref[...] = probs

    # ---- position-wise feed-forward ---------------------------------------------
    h1 = jnp.maximum(mm(x, ROW_FF1, H, 0, PF_DIM) + vrow(VROW_B1, 0, PF_DIM), 0.0)
    ff = mm(h1, ROW_FF2, PF_DIM, 0, H) + vrow(VROW_B2, 0, H)
    x = layer_norm(x + ff, 2)

    out_ref[...] = x.reshape(bb, T, H)


# ------------------------------ parameter packing -----------------------------
def _prepare_kernel_params(params, mxu_dtype=MXU_DTYPE):
    """Pack all weights into one lane-padded [W_ROWS,128] slab (ROW_* layout, bf16) and
    all biases / LayerNorm params into one [VEC_ROWS,128] f32 slab (VROW_* layout)."""
    w_attn, b_attn = params["w_attn"], params["b_attn"]

    def lane_pad(m):
        return jnp.pad(m, ((0, 0), (0, LANES - m.shape[-1])))

    wqkv0 = jnp.concatenate([w_attn[0, 0], w_attn[0, 1], w_attn[0, 2]], axis=1)  # [H,3H]
    wqkv1 = jnp.concatenate([w_attn[1, 0], w_attn[1, 1], w_attn[1, 2]], axis=1)
    w_slab = jnp.concatenate(
        [lane_pad(wqkv0),           # ROW_QKV0
         lane_pad(wqkv1),           # ROW_QKV1
         lane_pad(w_attn[0, 3]),    # ROW_O0
         lane_pad(w_attn[1, 3]),    # ROW_O1
         lane_pad(params["w1"]),    # ROW_FF1
         lane_pad(params["w2"])],   # ROW_FF2
        axis=0).astype(mxu_dtype)
    assert w_slab.shape == (W_ROWS, LANES)

    def vrow(v):
        return lane_pad(jnp.asarray(v, jnp.float32).reshape(1, -1))

    rows = [
        vrow(jnp.concatenate([b_attn[0, 0], b_attn[0, 1], b_attn[0, 2]])),  # BQKV0
        vrow(jnp.concatenate([b_attn[1, 0], b_attn[1, 1], b_attn[1, 2]])),  # BQKV1
        vrow(b_attn[0, 3]), vrow(b_attn[1, 3]),                             # BO0, BO1
        vrow(params["b1"]), vrow(params["b2"]),                             # B1, B2
        vrow(params["ln_g"][0]), vrow(params["ln_g"][1]), vrow(params["ln_g"][2]),
        vrow(params["ln_b"][0]), vrow(params["ln_b"][1]), vrow(params["ln_b"][2]),
    ]
    vec_slab = jnp.concatenate(
        rows + [jnp.zeros((VEC_ROWS - len(rows), LANES), jnp.float32)], axis=0)
    assert vec_slab.shape == (VEC_ROWS, LANES)
    return w_slab, vec_slab


# ------------------------------- wrapper ---------------------------------------
def _round_up(x, m):
    return (x + m - 1) // m * m


def _num_tensorcores():
    """TensorCores Pallas can shard a 'parallel' grid axis over (host-side, not traced)."""
    try:  # structured query first
        info = pltpu.get_tpu_info()
        for name in ("num_cores", "core_count", "num_tensorcores"):
            n = getattr(info, name, None)
            if isinstance(n, int) and n > 0:
                return n
    except Exception:
        pass
    try:
        kind = jax.devices()[0].device_kind.lower()
    except Exception:
        return 1
    return 2 if "v7" in kind else 1     # v7x: 2 TCs/chip; v5e/v6e: 1


@partial(jax.jit, static_argnames=("num_cores",))
def _decoder_layer(trg, enc_src, trg_mask, src_mask, w_slab, vec_slab, *, num_cores=1):
    B, T, H = trg.shape
    S = enc_src.shape[1]
    tq, sq = trg_mask.shape[1], src_mask.shape[1]

    tmask = trg_mask.astype(jnp.float32)
    smask = src_mask.astype(jnp.float32)

    # ---- pad sequence lengths to sublane multiples so the batch folds trivially ----
    Tp = _round_up(T, 8)
    Sp = _round_up(S, 8)
    S_out = _round_up(S, LANES)          # lane-dense attention-probability slab
    if Tp != T:
        trg = jnp.pad(trg, ((0, 0), (0, Tp - T), (0, 0)))
        tmask = jnp.pad(tmask, ((0, 0), (0, (Tp - T) if tq != 1 else 0), (0, Tp - T)))
    if Sp != S:
        enc_src = jnp.pad(enc_src, ((0, 0), (0, Sp - S), (0, 0)))
        smask = jnp.pad(smask, ((0, 0), (0, 0), (0, Sp - S)))   # padded keys masked out

    # ---- batch blocking: one fat batch block per TensorCore ------------------------
    G = max(1, min(num_cores, B))
    bb = (B + G - 1) // G
    Bp = G * bb
    if Bp != B:                                          # ragged B: pad, slice at the end
        trg = jnp.pad(trg, ((0, Bp - B), (0, 0), (0, 0)))
        enc_src = jnp.pad(enc_src, ((0, Bp - B), (0, 0), (0, 0)))
        tmask = jnp.pad(tmask, ((0, Bp - B), (0, 0), (0, 0)))
        smask = jnp.pad(smask, ((0, Bp - B), (0, 0), (0, 0)))
    tq, sq = tmask.shape[1], smask.shape[1]

    # Per-step VMEM footprint is ~0.2 MiB at these shapes (double-buffered), far under
    # the 32 MiB scoped default on every generation, so no vmem_limit_bytes override.
    grid_spec = pltpu.PrefetchScalarGridSpec(
        num_scalar_prefetch=0,
        grid=(G,),
        in_specs=[
            pl.BlockSpec((bb, Tp, H), lambda g: (g, 0, 0)),
            pl.BlockSpec((bb, Sp, H), lambda g: (g, 0, 0)),
            pl.BlockSpec((bb, tq, Tp), lambda g: (g, 0, 0)),
            pl.BlockSpec((bb, sq, Sp), lambda g: (g, 0, 0)),
            pl.BlockSpec((W_ROWS, LANES), lambda g: (0, 0)),
            pl.BlockSpec((VEC_ROWS, LANES), lambda g: (0, 0)),
        ],
        out_specs=[
            pl.BlockSpec((bb, Tp, H), lambda g: (g, 0, 0)),
            pl.BlockSpec((bb, N_HEADS, Tp, S_out), lambda g: (g, 0, 0, 0)),
        ],
    )

    out, attn = pl.pallas_call(
        decoder_layer_kernel,
        out_shape=(
            jax.ShapeDtypeStruct((Bp, Tp, H), jnp.float32),
            jax.ShapeDtypeStruct((Bp, N_HEADS, Tp, S_out), jnp.float32),
        ),
        grid_spec=grid_spec,
        compiler_params=pltpu.CompilerParams(dimension_semantics=("parallel",)),
    )(trg, enc_src, tmask, smask, w_slab, vec_slab)

    return out[:B, :T], attn[:B, :, :T, :S]


def decoder_layer(trg, enc_src, trg_mask, src_mask, w_slab, vec_slab):
    return _decoder_layer(trg, enc_src, trg_mask, src_mask, w_slab, vec_slab,
                          num_cores=_num_tensorcores())


# ----------------------------- pure-JAX reference -----------------------------
def reference_decoder_layer(trg, enc_src, trg_mask, src_mask, params):
    def mha(xq, xkv, mask, layer):
        B, Tq, H = xq.shape
        Tk = xkv.shape[1]
        q = xq @ params["w_attn"][layer, 0] + params["b_attn"][layer, 0]
        k = xkv @ params["w_attn"][layer, 1] + params["b_attn"][layer, 1]
        v = xkv @ params["w_attn"][layer, 2] + params["b_attn"][layer, 2]
        q = q.reshape(B, Tq, N_HEADS, HEAD_DIM).transpose(0, 2, 1, 3)
        k = k.reshape(B, Tk, N_HEADS, HEAD_DIM).transpose(0, 2, 1, 3)
        v = v.reshape(B, Tk, N_HEADS, HEAD_DIM).transpose(0, 2, 1, 3)
        energy = jnp.einsum("bhqd,bhkd->bhqk", q, k) / jnp.sqrt(jnp.float32(HEAD_DIM))
        energy = jnp.where(mask == 0, NEG_INF, energy)
        attn = jax.nn.softmax(energy, axis=-1)
        ctx = jnp.einsum("bhqk,bhkd->bhqd", attn, v)
        ctx = ctx.transpose(0, 2, 1, 3).reshape(B, Tq, H)
        out = ctx @ params["w_attn"][layer, 3] + params["b_attn"][layer, 3]
        return out, attn

    def ln(x, idx):
        mu = jnp.mean(x, axis=-1, keepdims=True)
        var = jnp.mean((x - mu) ** 2, axis=-1, keepdims=True)
        return (x - mu) / jnp.sqrt(var + EPS) * params["ln_g"][idx] + params["ln_b"][idx]

    sa, _ = mha(trg, trg, trg_mask[:, None, :, :], 0)
    x = ln(trg + sa, 0)
    ea, attn = mha(x, enc_src, src_mask[:, None, :, :], 1)
    x = ln(x + ea, 1)
    h1 = jax.nn.relu(x @ params["w1"] + params["b1"])
    ff = h1 @ params["w2"] + params["b2"]
    x = ln(x + ff, 2)
    return x, attn


# ---------------------------------- main --------------------------------------
if __name__ == "__main__":
    B, T, S = 2, 8, 10

    key = jax.random.PRNGKey(0)
    keys = jax.random.split(key, 10)

    params = {
        "w_attn": 0.1 * jax.random.normal(keys[0], (2, 4, HID_DIM, HID_DIM), jnp.float32),
        "b_attn": 0.05 * jax.random.normal(keys[1], (2, 4, HID_DIM), jnp.float32),
        "ln_g": 1.0 + 0.05 * jax.random.normal(keys[2], (3, HID_DIM), jnp.float32),
        "ln_b": 0.05 * jax.random.normal(keys[3], (3, HID_DIM), jnp.float32),
        "w1": 0.1 * jax.random.normal(keys[4], (HID_DIM, PF_DIM), jnp.float32),
        "b1": 0.05 * jax.random.normal(keys[5], (1, PF_DIM), jnp.float32),
        "w2": 0.1 * jax.random.normal(keys[6], (PF_DIM, HID_DIM), jnp.float32),
        "b2": 0.05 * jax.random.normal(keys[7], (1, HID_DIM), jnp.float32),
    }

    trg = jax.random.normal(keys[8], (B, T, HID_DIM), jnp.float32)
    enc_src = jax.random.normal(keys[9], (B, S, HID_DIM), jnp.float32)

    # causal target mask [B, T, T]; source padding mask in compact [B, 1, S] form
    trg_mask = jnp.broadcast_to(jnp.tril(jnp.ones((T, T), jnp.float32))[None], (B, T, T))
    src_valid = (jnp.arange(S) < (S - 2)).astype(jnp.float32)
    src_mask = jnp.broadcast_to(src_valid[None, None, :], (B, 1, S))

    w_slab, vec_slab = _prepare_kernel_params(params)
    out, attn = decoder_layer(trg, enc_src, trg_mask, src_mask, w_slab, vec_slab)
    out, attn = jax.block_until_ready((out, attn))

    ref_out, ref_attn = reference_decoder_layer(trg, enc_src, trg_mask, src_mask, params)

    assert out.shape == (B, T, HID_DIM)
    assert attn.shape == (B, N_HEADS, T, S)
    # tolerance covers bf16 MXU-input rounding (f32 accumulation, f32 LN/softmax)
    assert jnp.allclose(out, ref_out, rtol=5e-2, atol=5e-2), "output mismatch"
    assert jnp.allclose(attn, ref_attn, rtol=5e-2, atol=5e-2), "attention mismatch"

    print("KERNEL_OK")
</pallas_src>

<mosaic_0001>
module attributes {stable_mosaic.version = 11 : i64} {
  func.func @decoder_layer_kernel(%arg0: i32, %arg1: memref<2x8x32xf32, #tpu.memory_space<vmem>>, %arg2: memref<2x16x32xf32, #tpu.memory_space<vmem>>, %arg3: memref<2x8x8xf32, #tpu.memory_space<vmem>>, %arg4: memref<2x1x16xf32, #tpu.memory_space<vmem>>, %arg5: memref<224x128xbf16, #tpu.memory_space<vmem>>, %arg6: memref<16x128xf32, #tpu.memory_space<vmem>>, %arg7: memref<2x8x32xf32, #tpu.memory_space<vmem>>, %arg8: memref<2x4x8x128xf32, #tpu.memory_space<vmem>>) attributes {dimension_semantics = [#tpu.dimension_semantics<parallel>], iteration_bounds = array<i64: 1>, scalar_prefetch = 0 : i64, scratch_operands = 0 : i64, tpu.core_type = #tpu.core_type<tc>, window_params = [{transform_indices = @transform_0, window_bounds = array<i64: 2, 8, 32>}, {transform_indices = @transform_1, window_bounds = array<i64: 2, 16, 32>}, {transform_indices = @transform_2, window_bounds = array<i64: 2, 8, 8>}, {transform_indices = @transform_3, window_bounds = array<i64: 2, 1, 16>}, {pipeline_mode = #tpu.pipeline_mode<synchronous>, transform_indices = @transform_4, window_bounds = array<i64: 224, 128>}, {pipeline_mode = #tpu.pipeline_mode<synchronous>, transform_indices = @transform_5, window_bounds = array<i64: 16, 128>}, {transform_indices = @transform_6, window_bounds = array<i64: 2, 8, 32>}, {transform_indices = @transform_7, window_bounds = array<i64: 2, 4, 8, 128>}]} {
    %c0 = arith.constant 0 : index
    %c0_0 = arith.constant 0 : index
    %c0_1 = arith.constant 0 : index
    %0 = vector.load %arg1[%c0, %c0_0, %c0_1] : memref<2x8x32xf32, #tpu.memory_space<vmem>>, vector<2x8x32xf32>
    %1 = vector.shape_cast %0 : vector<2x8x32xf32> to vector<16x32xf32>
    %c0_2 = arith.constant 0 : index
    %c0_3 = arith.constant 0 : index
    %c0_4 = arith.constant 0 : index
    %2 = vector.load %arg2[%c0_2, %c0_3, %c0_4] : memref<2x16x32xf32, #tpu.memory_space<vmem>>, vector<2x16x32xf32>
    %3 = vector.shape_cast %2 : vector<2x16x32xf32> to vector<32x32xf32>
    %c0_5 = arith.constant 0 : index
    %c0_6 = arith.constant 0 : index
    %c0_7 = arith.constant 0 : index
    %4 = vector.load %arg3[%c0_5, %c0_6, %c0_7] : memref<2x8x8xf32, #tpu.memory_space<vmem>>, vector<2x8x8xf32>
    %cst = arith.constant 0.000000e+00 : f32
    %5 = vector.broadcast %cst : f32 to vector<2x8x8xf32>
    %6 = arith.cmpf oeq, %4, %5 : vector<2x8x8xf32>
    %cst_8 = arith.constant -1.000000e+10 : f32
    %cst_9 = arith.constant 0.000000e+00 : f32
    %7 = vector.broadcast %cst_8 : f32 to vector<2x8x8xf32>
    %8 = vector.broadcast %cst_9 : f32 to vector<2x8x8xf32>
    %9 = arith.select %6, %7, %8 : vector<2x8x8xi1>, vector<2x8x8xf32>
    %c0_10 = arith.constant 0 : index
    %c0_11 = arith.constant 0 : index
    %c0_12 = arith.constant 0 : index
    %10 = vector.load %arg4[%c0_10, %c0_11, %c0_12] : memref<2x1x16xf32, #tpu.memory_space<vmem>>, vector<2x1x16xf32>
    %cst_13 = arith.constant 0.000000e+00 : f32
    %11 = vector.broadcast %cst_13 : f32 to vector<2x1x16xf32>
    %12 = arith.cmpf oeq, %10, %11 : vector<2x1x16xf32>
    %cst_14 = arith.constant -1.000000e+10 : f32
    %cst_15 = arith.constant 0.000000e+00 : f32
    %13 = vector.broadcast %cst_14 : f32 to vector<2x1x16xf32>
    %14 = vector.broadcast %cst_15 : f32 to vector<2x1x16xf32>
    %15 = arith.select %12, %13, %14 : vector<2x1x16xi1>, vector<2x1x16xf32>
    %c0_16 = arith.constant 0 : index
    %c0_17 = arith.constant 0 : index
    %16 = vector.load %arg5[%c0_16, %c0_17] : memref<224x128xbf16, #tpu.memory_space<vmem>>, vector<32x96xbf16>
    %17 = arith.truncf %1 : vector<16x32xf32> to vector<16x32xbf16>
    %cst_18 = arith.constant dense<0.000000e+00> : vector<16x96xf32>
    %18 = tpu.matmul %17, %16, %cst_18 {dimension_numbers = #tpu.dot_dimension_numbers<[1], [0], [0], [1], [0, 0, 1, 1], [], []>} : vector<16x32xbf16>, vector<32x96xbf16>, vector<16x96xf32> -> vector<16x96xf32>
    %c0_19 = arith.constant 0 : index
    %c0_20 = arith.constant 0 : index
    %19 = vector.load %arg6[%c0_19, %c0_20] : memref<16x128xf32, #tpu.memory_space<vmem>>, vector<1x96xf32>
    %20 = vector.broadcast %19 : vector<1x96xf32> to vector<16x96xf32>
    %21 = arith.addf %18, %20 : vector<16x96xf32>
    %22 = vector.extract_strided_slice %21 {offsets = [0, 0], sizes = [16, 32], strides = [1, 1]} : vector<16x96xf32> to vector<16x32xf32>
    %23 = vector.extract_strided_slice %21 {offsets = [0, 32], sizes = [16, 64], strides = [1, 1]} : vector<16x96xf32> to vector<16x64xf32>
    %24 = vector.shape_cast %22 : vector<16x32xf32> to vector<2x8x32xf32>
    %25 = vector.shape_cast %23 : vector<16x64xf32> to vector<2x8x64xf32>
    %26 = vector.extract_strided_slice %24 {offsets = [0, 0, 0], sizes = [2, 8, 8], strides = [1, 1, 1]} : vector<2x8x32xf32> to vector<2x8x8xf32>
    %27 = arith.truncf %26 : vector<2x8x8xf32> to vector<2x8x8xbf16>
    %28 = vector.extract_strided_slice %25 {offsets = [0, 0, 0], sizes = [2, 8, 8], strides = [1, 1, 1]} : vector<2x8x64xf32> to vector<2x8x8xf32>
    %29 = arith.truncf %28 : vector<2x8x8xf32> to vector<2x8x8xbf16>
    %30 = vector.extract_strided_slice %25 {offsets = [0, 0, 32], sizes = [2, 8, 8], strides = [1, 1, 1]} : vector<2x8x64xf32> to vector<2x8x8xf32>
    %31 = arith.truncf %30 : vector<2x8x8xf32> to vector<2x8x8xbf16>
    "tpu.trace_start"() <{level = 10 : i32, message = "bqd,bkd->bqk"}> : () -> ()
    %cst_21 = arith.constant dense<0.000000e+00> : vector<2x8x8xf32>
    %32 = tpu.matmul %27, %29, %cst_21 {dimension_numbers = #tpu.dot_dimension_numbers<[2], [2], [1], [1], [0, 0, 0, 1, 1, 1], [0], [0]>} : vector<2x8x8xbf16>, vector<2x8x8xbf16>, vector<2x8x8xf32> -> vector<2x8x8xf32>
    "tpu.trace_stop"() : () -> ()
    %cst_22 = arith.constant 0.353553385 : f32
    %33 = vector.broadcast %cst_22 : f32 to vector<2x8x8xf32>
    %34 = arith.mulf %32, %33 : vector<2x8x8xf32>
    %35 = arith.addf %34, %9 : vector<2x8x8xf32>
    %cst_23 = arith.constant dense<0xFF800000> : vector<2x8xf32>
    %36 = vector.multi_reduction <maximumf>, %35, %cst_23 [2] : vector<2x8x8xf32> to vector<2x8xf32>
    %37 = vector.shape_cast %36 : vector<2x8xf32> to vector<2x8x1xf32>
    %38 = vector.broadcast %37 : vector<2x8x1xf32> to vector<2x8x8xf32>
    %39 = arith.subf %35, %38 : vector<2x8x8xf32>
    %40 = math.exp %39 : vector<2x8x8xf32>
    %cst_24 = arith.constant dense<0.000000e+00> : vector<2x8xf32>
    %41 = vector.multi_reduction <add>, %40, %cst_24 [2] : vector<2x8x8xf32> to vector<2x8xf32>
    %42 = vector.shape_cast %41 : vector<2x8xf32> to vector<2x8x1xf32>
    %cst_25 = arith.constant 1.000000e+00 : f32
    %43 = vector.broadcast %cst_25 : f32 to vector<2x8x1xf32>
    %44 = arith.divf %43, %42 : vector<2x8x1xf32>
    %45 = vector.broadcast %44 : vector<2x8x1xf32> to vector<2x8x8xf32>
    %46 = arith.mulf %40, %45 : vector<2x8x8xf32>
    %47 = arith.truncf %46 : vector<2x8x8xf32> to vector<2x8x8xbf16>
    "tpu.trace_start"() <{level = 10 : i32, message = "bqk,bkd->bqd"}> : () -> ()
    %cst_26 = arith.constant dense<0.000000e+00> : vector<2x8x8xf32>
    %48 = tpu.matmul %47, %31, %cst_26 {dimension_numbers = #tpu.dot_dimension_numbers<[2], [1], [1], [2], [0, 0, 0, 1, 1, 2], [0], [0]>} : vector<2x8x8xbf16>, vector<2x8x8xbf16>, vector<2x8x8xf32> -> vector<2x8x8xf32>
    "tpu.trace_stop"() : () -> ()
    %49 = vector.extract_strided_slice %24 {offsets = [0, 0, 8], sizes = [2, 8, 8], strides = [1, 1, 1]} : vector<2x8x32xf32> to vector<2x8x8xf32>
    %50 = arith.truncf %49 : vector<2x8x8xf32> to vector<2x8x8xbf16>
    %51 = vector.extract_strided_slice %25 {offsets = [0, 0, 8], sizes = [2, 8, 8], strides = [1, 1, 1]} : vector<2x8x64xf32> to vector<2x8x8xf32>
    %52 = arith.truncf %51 : vector<2x8x8xf32> to vector<2x8x8xbf16>
    %53 = vector.extract_strided_slice %25 {offsets = [0, 0, 40], sizes = [2, 8, 8], strides = [1, 1, 1]} : vector<2x8x64xf32> to vector<2x8x8xf32>
    %54 = arith.truncf %53 : vector<2x8x8xf32> to vector<2x8x8xbf16>
    "tpu.trace_start"() <{level = 10 : i32, message = "bqd,bkd->bqk"}> : () -> ()
    %cst_27 = arith.constant dense<0.000000e+00> : vector<2x8x8xf32>
    %55 = tpu.matmul %50, %52, %cst_27 {dimension_numbers = #tpu.dot_dimension_numbers<[2], [2], [1], [1], [0, 0, 0, 1, 1, 1], [0], [0]>} : vector<2x8x8xbf16>, vector<2x8x8xbf16>, vector<2x8x8xf32> -> vector<2x8x8xf32>
    "tpu.trace_stop"() : () -> ()
    %cst_28 = arith.constant 0.353553385 : f32
    %56 = vector.broadcast %cst_28 : f32 to vector<2x8x8xf32>
    %57 = arith.mulf %55, %56 : vector<2x8x8xf32>
    %58 = arith.addf %57, %9 : vector<2x8x8xf32>
    %cst_29 = arith.constant dense<0xFF800000> : vector<2x8xf32>
    %59 = vector.multi_reduction <maximumf>, %58, %cst_29 [2] : vector<2x8x8xf32> to vector<2x8xf32>
    %60 = vector.shape_cast %59 : vector<2x8xf32> to vector<2x8x1xf32>
    %61 = vector.broadcast %60 : vector<2x8x1xf32> to vector<2x8x8xf32>
    %62 = arith.subf %58, %61 : vector<2x8x8xf32>
    %63 = math.exp %62 : vector<2x8x8xf32>
    %cst_30 = arith.constant dense<0.000000e+00> : vector<2x8xf32>
    %64 = vector.multi_reduction <add>, %63, %cst_30 [2] : vector<2x8x8xf32> to vector<2x8xf32>
    %65 = vector.shape_cast %64 : vector<2x8xf32> to vector<2x8x1xf32>
    %cst_31 = arith.constant 1.000000e+00 : f32
    %66 = vector.broadcast %cst_31 : f32 to vector<2x8x1xf32>
    %67 = arith.divf %66, %65 : vector<2x8x1xf32>
    %68 = vector.broadcast %67 : vector<2x8x1xf32> to vector<2x8x8xf32>
    %69 = arith.mulf %63, %68 : vector<2x8x8xf32>
    %70 = arith.truncf %69 : vector<2x8x8xf32> to vector<2x8x8xbf16>
    "tpu.trace_start"() <{level = 10 : i32, message = "bqk,bkd->bqd"}> : () -> ()
    %cst_32 = arith.constant dense<0.000000e+00> : vector<2x8x8xf32>
    %71 = tpu.matmul %70, %54, %cst_32 {dimension_numbers = #tpu.dot_dimension_numbers<[2], [1], [1], [2], [0, 0, 0, 1, 1, 2], [0], [0]>} : vector<2x8x8xbf16>, vector<2x8x8xbf16>, vector<2x8x8xf32> -> vector<2x8x8xf32>
    "tpu.trace_stop"() : () -> ()
    %72 = vector.extract_strided_slice %24 {offsets = [0, 0, 16], sizes = [2, 8, 8], strides = [1, 1, 1]} : vector<2x8x32xf32> to vector<2x8x8xf32>
    %73 = arith.truncf %72 : vector<2x8x8xf32> to vector<2x8x8xbf16>
    %74 = vector.extract_strided_slice %25 {offsets = [0, 0, 16], sizes = [2, 8, 8], strides = [1, 1, 1]} : vector<2x8x64xf32> to vector<2x8x8xf32>
    %75 = arith.truncf %74 : vector<2x8x8xf32> to vector<2x8x8xbf16>
    %76 = vector.extract_strided_slice %25 {offsets = [0, 0, 48], sizes = [2, 8, 8], strides = [1, 1, 1]} : vector<2x8x64xf32> to vector<2x8x8xf32>
    %77 = arith.truncf %76 : vector<2x8x8xf32> to vector<2x8x8xbf16>
    "tpu.trace_start"() <{level = 10 : i32, message = "bqd,bkd->bqk"}> : () -> ()
    %cst_33 = arith.constant dense<0.000000e+00> : vector<2x8x8xf32>
    %78 = tpu.matmul %73, %75, %cst_33 {dimension_numbers = #tpu.dot_dimension_numbers<[2], [2], [1], [1], [0, 0, 0, 1, 1, 1], [0], [0]>} : vector<2x8x8xbf16>, vector<2x8x8xbf16>, vector<2x8x8xf32> -> vector<2x8x8xf32>
    "tpu.trace_stop"() : () -> ()
    %cst_34 = arith.constant 0.353553385 : f32
    %79 = vector.broadcast %cst_34 : f32 to vector<2x8x8xf32>
    %80 = arith.mulf %78, %79 : vector<2x8x8xf32>
    %81 = arith.addf %80, %9 : vector<2x8x8xf32>
    %cst_35 = arith.constant dense<0xFF800000> : vector<2x8xf32>
    %82 = vector.multi_reduction <maximumf>, %81, %cst_35 [2] : vector<2x8x8xf32> to vector<2x8xf32>
    %83 = vector.shape_cast %82 : vector<2x8xf32> to vector<2x8x1xf32>
    %84 = vector.broadcast %83 : vector<2x8x1xf32> to vector<2x8x8xf32>
    %85 = arith.subf %81, %84 : vector<2x8x8xf32>
    %86 = math.exp %85 : vector<2x8x8xf32>
    %cst_36 = arith.constant dense<0.000000e+00> : vector<2x8xf32>
    %87 = vector.multi_reduction <add>, %86, %cst_36 [2] : vector<2x8x8xf32> to vector<2x8xf32>
    %88 = vector.shape_cast %87 : vector<2x8xf32> to vector<2x8x1xf32>
    %cst_37 = arith.constant 1.000000e+00 : f32
    %89 = vector.broadcast %cst_37 : f32 to vector<2x8x1xf32>
    %90 = arith.divf %89, %88 : vector<2x8x1xf32>
    %91 = vector.broadcast %90 : vector<2x8x1xf32> to vector<2x8x8xf32>
    %92 = arith.mulf %86, %91 : vector<2x8x8xf32>
    %93 = arith.truncf %92 : vector<2x8x8xf32> to vector<2x8x8xbf16>
    "tpu.trace_start"() <{level = 10 : i32, message = "bqk,bkd->bqd"}> : () -> ()
    %cst_38 = arith.constant dense<0.000000e+00> : vector<2x8x8xf32>
    %94 = tpu.matmul %93, %77, %cst_38 {dimension_numbers = #tpu.dot_dimension_numbers<[2], [1], [1], [2], [0, 0, 0, 1, 1, 2], [0], [0]>} : vector<2x8x8xbf16>, vector<2x8x8xbf16>, vector<2x8x8xf32> -> vector<2x8x8xf32>
    "tpu.trace_stop"() : () -> ()
    %95 = vector.extract_strided_slice %24 {offsets = [0, 0, 24], sizes = [2, 8, 8], strides = [1, 1, 1]} : vector<2x8x32xf32> to vector<2x8x8xf32>
    %96 = arith.truncf %95 : vector<2x8x8xf32> to vector<2x8x8xbf16>
    %97 = vector.extract_strided_slice %25 {offsets = [0, 0, 24], sizes = [2, 8, 8], strides = [1, 1, 1]} : vector<2x8x64xf32> to vector<2x8x8xf32>
    %98 = arith.truncf %97 : vector<2x8x8xf32> to vector<2x8x8xbf16>
    %99 = vector.extract_strided_slice %25 {offsets = [0, 0, 56], sizes = [2, 8, 8], strides = [1, 1, 1]} : vector<2x8x64xf32> to vector<2x8x8xf32>
    %100 = arith.truncf %99 : vector<2x8x8xf32> to vector<2x8x8xbf16>
    "tpu.trace_start"() <{level = 10 : i32, message = "bqd,bkd->bqk"}> : () -> ()
    %cst_39 = arith.constant dense<0.000000e+00> : vector<2x8x8xf32>
    %101 = tpu.matmul %96, %98, %cst_39 {dimension_numbers = #tpu.dot_dimension_numbers<[2], [2], [1], [1], [0, 0, 0, 1, 1, 1], [0], [0]>} : vector<2x8x8xbf16>, vector<2x8x8xbf16>, vector<2x8x8xf32> -> vector<2x8x8xf32>
    "tpu.trace_stop"() : () -> ()
    %cst_40 = arith.constant 0.353553385 : f32
    %102 = vector.broadcast %cst_40 : f32 to vector<2x8x8xf32>
    %103 = arith.mulf %101, %102 : vector<2x8x8xf32>
    %104 = arith.addf %103, %9 : vector<2x8x8xf32>
    %cst_41 = arith.constant dense<0xFF800000> : vector<2x8xf32>
    %105 = vector.multi_reduction <maximumf>, %104, %cst_41 [2] : vector<2x8x8xf32> to vector<2x8xf32>
    %106 = vector.shape_cast %105 : vector<2x8xf32> to vector<2x8x1xf32>
    %107 = vector.broadcast %106 : vector<2x8x1xf32> to vector<2x8x8xf32>
    %108 = arith.subf %104, %107 : vector<2x8x8xf32>
    %109 = math.exp %108 : vector<2x8x8xf32>
    %cst_42 = arith.constant dense<0.000000e+00> : vector<2x8xf32>
    %110 = vector.multi_reduction <add>, %109, %cst_42 [2] : vector<2x8x8xf32> to vector<2x8xf32>
    %111 = vector.shape_cast %110 : vector<2x8xf32> to vector<2x8x1xf32>
    %cst_43 = arith.constant 1.000000e+00 : f32
    %112 = vector.broadcast %cst_43 : f32 to vector<2x8x1xf32>
    %113 = arith.divf %112, %111 : vector<2x8x1xf32>
    %114 = vector.broadcast %113 : vector<2x8x1xf32> to vector<2x8x8xf32>
    %115 = arith.mulf %109, %114 : vector<2x8x8xf32>
    %116 = arith.truncf %115 : vector<2x8x8xf32> to vector<2x8x8xbf16>
    "tpu.trace_start"() <{level = 10 : i32, message = "bqk,bkd->bqd"}> : () -> ()
    %cst_44 = arith.constant dense<0.000000e+00> : vector<2x8x8xf32>
    %117 = tpu.matmul %116, %100, %cst_44 {dimension_numbers = #tpu.dot_dimension_numbers<[2], [1], [1], [2], [0, 0, 0, 1, 1, 2], [0], [0]>} : vector<2x8x8xbf16>, vector<2x8x8xbf16>, vector<2x8x8xf32> -> vector<2x8x8xf32>
    "tpu.trace_stop"() : () -> ()
    %118 = tpu.concatenate %48, %71, %94, %117 in 2 : vector<2x8x8xf32>, vector<2x8x8xf32>, vector<2x8x8xf32>, vector<2x8x8xf32> -> vector<2x8x32xf32>
    %119 = vector.shape_cast %118 : vector<2x8x32xf32> to vector<16x32xf32>
    %c64 = arith.constant 64 : index
    %c0_45 = arith.constant 0 : index
    %120 = vector.load %arg5[%c64, %c0_45] : memref<224x128xbf16, #tpu.memory_space<vmem>>, vector<32x32xbf16>
    %121 = arith.truncf %119 : vector<16x32xf32> to vector<16x32xbf16>
    %cst_46 = arith.constant dense<0.000000e+00> : vector<16x32xf32>
    %122 = tpu.matmul %121, %120, %cst_46 {dimension_numbers = #tpu.dot_dimension_numbers<[1], [0], [0], [1], [0, 0, 1, 1], [], []>} : vector<16x32xbf16>, vector<32x32xbf16>, vector<16x32xf32> -> vector<16x32xf32>
    %c2 = arith.constant 2 : index
    %c0_47 = arith.constant 0 : index
    %123 = vector.load %arg6[%c2, %c0_47] : memref<16x128xf32, #tpu.memory_space<vmem>>, vector<1x32xf32>
    %124 = vector.broadcast %123 : vector<1x32xf32> to vector<16x32xf32>
    %125 = arith.addf %122, %124 : vector<16x32xf32>
    %126 = arith.addf %1, %125 : vector<16x32xf32>
    %cst_48 = arith.constant dense<0.000000e+00> : vector<16xf32>
    %127 = vector.multi_reduction <add>, %126, %cst_48 [1] : vector<16x32xf32> to vector<16xf32>
    %128 = vector.shape_cast %127 : vector<16xf32> to vector<16x1xf32>
    %cst_49 = arith.constant 3.200000e+01 : f32
    %129 = vector.broadcast %cst_49 : f32 to vector<16x1xf32>
    %130 = arith.divf %128, %129 : vector<16x1xf32>
    %131 = vector.broadcast %130 : vector<16x1xf32> to vector<16x32xf32>
    %132 = arith.subf %126, %131 : vector<16x32xf32>
    %133 = arith.mulf %132, %132 : vector<16x32xf32>
    %cst_50 = arith.constant dense<0.000000e+00> : vector<16xf32>
    %134 = vector.multi_reduction <add>, %133, %cst_50 [1] : vector<16x32xf32> to vector<16xf32>
    %135 = vector.shape_cast %134 : vector<16xf32> to vector<16x1xf32>
    %cst_51 = arith.constant 3.200000e+01 : f32
    %136 = vector.broadcast %cst_51 : f32 to vector<16x1xf32>
    %137 = arith.divf %135, %136 : vector<16x1xf32>
    %138 = vector.broadcast %130 : vector<16x1xf32> to vector<16x32xf32>
    %139 = arith.subf %126, %138 : vector<16x32xf32>
    %cst_52 = arith.constant 9.99999974E-6 : f32
    %140 = vector.broadcast %cst_52 : f32 to vector<16x1xf32>
    %141 = arith.addf %137, %140 : vector<16x1xf32>
    %142 = math.rsqrt %141 : vector<16x1xf32>
    %143 = vector.broadcast %142 : vector<16x1xf32> to vector<16x32xf32>
    %144 = arith.mulf %139, %143 : vector<16x32xf32>
    %c6 = arith.constant 6 : index
    %c0_53 = arith.constant 0 : index
    %145 = vector.load %arg6[%c6, %c0_53] : memref<16x128xf32, #tpu.memory_space<vmem>>, vector<1x32xf32>
    %146 = vector.broadcast %145 : vector<1x32xf32> to vector<16x32xf32>
    %147 = arith.mulf %144, %146 : vector<16x32xf32>
    %c9 = arith.constant 9 : index
    %c0_54 = arith.constant 0 : index
    %148 = vector.load %arg6[%c9, %c0_54] : memref<16x128xf32, #tpu.memory_space<vmem>>, vector<1x32xf32>
    %149 = vector.broadcast %148 : vector<1x32xf32> to vector<16x32xf32>
    %150 = arith.addf %147, %149 : vector<16x32xf32>
    %c32 = arith.constant 32 : index
    %c0_55 = arith.constant 0 : index
    %151 = vector.load %arg5[%c32, %c0_55] : memref<224x128xbf16, #tpu.memory_space<vmem>>, vector<32x32xbf16>
    %152 = arith.truncf %150 : vector<16x32xf32> to vector<16x32xbf16>
    %cst_56 = arith.constant dense<0.000000e+00> : vector<16x32xf32>
    %153 = tpu.matmul %152, %151, %cst_56 {dimension_numbers = #tpu.dot_dimension_numbers<[1], [0], [0], [1], [0, 0, 1, 1], [], []>} : vector<16x32xbf16>, vector<32x32xbf16>, vector<16x32xf32> -> vector<16x32xf32>
    %c1 = arith.constant 1 : index
    %c0_57 = arith.constant 0 : index
    %154 = vector.load %arg6[%c1, %c0_57] : memref<16x128xf32, #tpu.memory_space<vmem>>, vector<1x32xf32>
    %155 = vector.broadcast %154 : vector<1x32xf32> to vector<16x32xf32>
    %156 = arith.addf %153, %155 : vector<16x32xf32>
    %c32_58 = arith.constant 32 : index
    %c32_59 = arith.constant 32 : index
    %157 = vector.load %arg5[%c32_58, %c32_59] : memref<224x128xbf16, #tpu.memory_space<vmem>>, vector<32x64xbf16>
    %158 = arith.truncf %3 : vector<32x32xf32> to vector<32x32xbf16>
    %cst_60 = arith.constant dense<0.000000e+00> : vector<32x64xf32>
    %159 = tpu.matmul %158, %157, %cst_60 {dimension_numbers = #tpu.dot_dimension_numbers<[1], [0], [0], [1], [0, 0, 1, 1], [], []>} : vector<32x32xbf16>, vector<32x64xbf16>, vector<32x64xf32> -> vector<32x64xf32>
    %c1_61 = arith.constant 1 : index
    %c32_62 = arith.constant 32 : index
    %160 = vector.load %arg6[%c1_61, %c32_62] : memref<16x128xf32, #tpu.memory_space<vmem>>, vector<1x64xf32>
    %161 = vector.broadcast %160 : vector<1x64xf32> to vector<32x64xf32>
    %162 = arith.addf %159, %161 : vector<32x64xf32>
    %163 = vector.shape_cast %156 : vector<16x32xf32> to vector<2x8x32xf32>
    %164 = vector.shape_cast %162 : vector<32x64xf32> to vector<2x16x64xf32>
    %165 = vector.extract_strided_slice %163 {offsets = [0, 0, 0], sizes = [2, 8, 8], strides = [1, 1, 1]} : vector<2x8x32xf32> to vector<2x8x8xf32>
    %166 = arith.truncf %165 : vector<2x8x8xf32> to vector<2x8x8xbf16>
    %167 = vector.extract_strided_slice %164 {offsets = [0, 0, 0], sizes = [2, 16, 8], strides = [1, 1, 1]} : vector<2x16x64xf32> to vector<2x16x8xf32>
    %168 = arith.truncf %167 : vector<2x16x8xf32> to vector<2x16x8xbf16>
    %169 = vector.extract_strided_slice %164 {offsets = [0, 0, 32], sizes = [2, 16, 8], strides = [1, 1, 1]} : vector<2x16x64xf32> to vector<2x16x8xf32>
    %170 = arith.truncf %169 : vector<2x16x8xf32> to vector<2x16x8xbf16>
    "tpu.trace_start"() <{level = 10 : i32, message = "bqd,bkd->bqk"}> : () -> ()
    %cst_63 = arith.constant dense<0.000000e+00> : vector<2x8x16xf32>
    %171 = tpu.matmul %166, %168, %cst_63 {dimension_numbers = #tpu.dot_dimension_numbers<[2], [2], [1], [1], [0, 0, 0, 1, 1, 1], [0], [0]>} : vector<2x8x8xbf16>, vector<2x16x8xbf16>, vector<2x8x16xf32> -> vector<2x8x16xf32>
    "tpu.trace_stop"() : () -> ()
    %cst_64 = arith.constant 0.353553385 : f32
    %172 = vector.broadcast %cst_64 : f32 to vector<2x8x16xf32>
    %173 = arith.mulf %171, %172 : vector<2x8x16xf32>
    %174 = vector.broadcast %15 : vector<2x1x16xf32> to vector<2x8x16xf32>
    %175 = arith.addf %173, %174 : vector<2x8x16xf32>
    %cst_65 = arith.constant dense<0xFF800000> : vector<2x8xf32>
    %176 = vector.multi_reduction <maximumf>, %175, %cst_65 [2] : vector<2x8x16xf32> to vector<2x8xf32>
    %177 = vector.shape_cast %176 : vector<2x8xf32> to vector<2x8x1xf32>
    %178 = vector.broadcast %177 : vector<2x8x1xf32> to vector<2x8x16xf32>
    %179 = arith.subf %175, %178 : vector<2x8x16xf32>
    %180 = math.exp %179 : vector<2x8x16xf32>
    %cst_66 = arith.constant dense<0.000000e+00> : vector<2x8xf32>
    %181 = vector.multi_reduction <add>, %180, %cst_66 [2] : vector<2x8x16xf32> to vector<2x8xf32>
    %182 = vector.shape_cast %181 : vector<2x8xf32> to vector<2x8x1xf32>
    %cst_67 = arith.constant 1.000000e+00 : f32
    %183 = vector.broadcast %cst_67 : f32 to vector<2x8x1xf32>
    %184 = arith.divf %183, %182 : vector<2x8x1xf32>
    %185 = vector.broadcast %184 : vector<2x8x1xf32> to vector<2x8x16xf32>
    %186 = arith.mulf %180, %185 : vector<2x8x16xf32>
    %187 = arith.truncf %186 : vector<2x8x16xf32> to vector<2x8x16xbf16>
    "tpu.trace_start"() <{level = 10 : i32, message = "bqk,bkd->bqd"}> : () -> ()
    %cst_68 = arith.constant dense<0.000000e+00> : vector<2x8x8xf32>
    %188 = tpu.matmul %187, %170, %cst_68 {dimension_numbers = #tpu.dot_dimension_numbers<[2], [1], [1], [2], [0, 0, 0, 1, 1, 2], [0], [0]>} : vector<2x8x16xbf16>, vector<2x16x8xbf16>, vector<2x8x8xf32> -> vector<2x8x8xf32>
    "tpu.trace_stop"() : () -> ()
    %189 = vector.shape_cast %186 : vector<2x8x16xf32> to vector<2x1x8x16xf32>
    %190 = vector.extract_strided_slice %163 {offsets = [0, 0, 8], sizes = [2, 8, 8], strides = [1, 1, 1]} : vector<2x8x32xf32> to vector<2x8x8xf32>
    %191 = arith.truncf %190 : vector<2x8x8xf32> to vector<2x8x8xbf16>
    %192 = vector.extract_strided_slice %164 {offsets = [0, 0, 8], sizes = [2, 16, 8], strides = [1, 1, 1]} : vector<2x16x64xf32> to vector<2x16x8xf32>
    %193 = arith.truncf %192 : vector<2x16x8xf32> to vector<2x16x8xbf16>
    %194 = vector.extract_strided_slice %164 {offsets = [0, 0, 40], sizes = [2, 16, 8], strides = [1, 1, 1]} : vector<2x16x64xf32> to vector<2x16x8xf32>
    %195 = arith.truncf %194 : vector<2x16x8xf32> to vector<2x16x8xbf16>
    "tpu.trace_start"() <{level = 10 : i32, message = "bqd,bkd->bqk"}> : () -> ()
    %cst_69 = arith.constant dense<0.000000e+00> : vector<2x8x16xf32>
    %196 = tpu.matmul %191, %193, %cst_69 {dimension_numbers = #tpu.dot_dimension_numbers<[2], [2], [1], [1], [0, 0, 0, 1, 1, 1], [0], [0]>} : vector<2x8x8xbf16>, vector<2x16x8xbf16>, vector<2x8x16xf32> -> vector<2x8x16xf32>
    "tpu.trace_stop"() : () -> ()
    %cst_70 = arith.constant 0.353553385 : f32
    %197 = vector.broadcast %cst_70 : f32 to vector<2x8x16xf32>
    %198 = arith.mulf %196, %197 : vector<2x8x16xf32>
    %199 = vector.broadcast %15 : vector<2x1x16xf32> to vector<2x8x16xf32>
    %200 = arith.addf %198, %199 : vector<2x8x16xf32>
    %cst_71 = arith.constant dense<0xFF800000> : vector<2x8xf32>
    %201 = vector.multi_reduction <maximumf>, %200, %cst_71 [2] : vector<2x8x16xf32> to vector<2x8xf32>
    %202 = vector.shape_cast %201 : vector<2x8xf32> to vector<2x8x1xf32>
    %203 = vector.broadcast %202 : vector<2x8x1xf32> to vector<2x8x16xf32>
    %204 = arith.subf %200, %203 : vector<2x8x16xf32>
    %205 = math.exp %204 : vector<2x8x16xf32>
    %cst_72 = arith.constant dense<0.000000e+00> : vector<2x8xf32>
    %206 = vector.multi_reduction <add>, %205, %cst_72 [2] : vector<2x8x16xf32> to vector<2x8xf32>
    %207 = vector.shape_cast %206 : vector<2x8xf32> to vector<2x8x1xf32>
    %cst_73 = arith.constant 1.000000e+00 : f32
    %208 = vector.broadcast %cst_73 : f32 to vector<2x8x1xf32>
    %209 = arith.divf %208, %207 : vector<2x8x1xf32>
    %210 = vector.broadcast %209 : vector<2x8x1xf32> to vector<2x8x16xf32>
    %211 = arith.mulf %205, %210 : vector<2x8x16xf32>
    %212 = arith.truncf %211 : vector<2x8x16xf32> to vector<2x8x16xbf16>
    "tpu.trace_start"() <{level = 10 : i32, message = "bqk,bkd->bqd"}> : () -> ()
    %cst_74 = arith.constant dense<0.000000e+00> : vector<2x8x8xf32>
    %213 = tpu.matmul %212, %195, %cst_74 {dimension_numbers = #tpu.dot_dimension_numbers<[2], [1], [1], [2], [0, 0, 0, 1, 1, 2], [0], [0]>} : vector<2x8x16xbf16>, vector<2x16x8xbf16>, vector<2x8x8xf32> -> vector<2x8x8xf32>
    "tpu.trace_stop"() : () -> ()
    %214 = vector.shape_cast %211 : vector<2x8x16xf32> to vector<2x1x8x16xf32>
    %215 = vector.extract_strided_slice %163 {offsets = [0, 0, 16], sizes = [2, 8, 8], strides = [1, 1, 1]} : vector<2x8x32xf32> to vector<2x8x8xf32>
    %216 = arith.truncf %215 : vector<2x8x8xf32> to vector<2x8x8xbf16>
    %217 = vector.extract_strided_slice %164 {offsets = [0, 0, 16], sizes = [2, 16, 8], strides = [1, 1, 1]} : vector<2x16x64xf32> to vector<2x16x8xf32>
    %218 = arith.truncf %217 : vector<2x16x8xf32> to vector<2x16x8xbf16>
    %219 = vector.extract_strided_slice %164 {offsets = [0, 0, 48], sizes = [2, 16, 8], strides = [1, 1, 1]} : vector<2x16x64xf32> to vector<2x16x8xf32>
    %220 = arith.truncf %219 : vector<2x16x8xf32> to vector<2x16x8xbf16>
    "tpu.trace_start"() <{level = 10 : i32, message = "bqd,bkd->bqk"}> : () -> ()
    %cst_75 = arith.constant dense<0.000000e+00> : vector<2x8x16xf32>
    %221 = tpu.matmul %216, %218, %cst_75 {dimension_numbers = #tpu.dot_dimension_numbers<[2], [2], [1], [1], [0, 0, 0, 1, 1, 1], [0], [0]>} : vector<2x8x8xbf16>, vector<2x16x8xbf16>, vector<2x8x16xf32> -> vector<2x8x16xf32>
    "tpu.trace_stop"() : () -> ()
    %cst_76 = arith.constant 0.353553385 : f32
    %222 = vector.broadcast %cst_76 : f32 to vector<2x8x16xf32>
    %223 = arith.mulf %221, %222 : vector<2x8x16xf32>
    %224 = vector.broadcast %15 : vector<2x1x16xf32> to vector<2x8x16xf32>
    %225 = arith.addf %223, %224 : vector<2x8x16xf32>
    %cst_77 = arith.constant dense<0xFF800000> : vector<2x8xf32>
    %226 = vector.multi_reduction <maximumf>, %225, %cst_77 [2] : vector<2x8x16xf32> to vector<2x8xf32>
    %227 = vector.shape_cast %226 : vector<2x8xf32> to vector<2x8x1xf32>
    %228 = vector.broadcast %227 : vector<2x8x1xf32> to vector<2x8x16xf32>
    %229 = arith.subf %225, %228 : vector<2x8x16xf32>
    %230 = math.exp %229 : vector<2x8x16xf32>
    %cst_78 = arith.constant dense<0.000000e+00> : vector<2x8xf32>
    %231 = vector.multi_reduction <add>, %230, %cst_78 [2] : vector<2x8x16xf32> to vector<2x8xf32>
    %232 = vector.shape_cast %231 : vector<2x8xf32> to vector<2x8x1xf32>
    %cst_79 = arith.constant 1.000000e+00 : f32
    %233 = vector.broadcast %cst_79 : f32 to vector<2x8x1xf32>
    %234 = arith.divf %233, %232 : vector<2x8x1xf32>
    %235 = vector.broadcast %234 : vector<2x8x1xf32> to vector<2x8x16xf32>
    %236 = arith.mulf %230, %235 : vector<2x8x16xf32>
    %237 = arith.truncf %236 : vector<2x8x16xf32> to vector<2x8x16xbf16>
    "tpu.trace_start"() <{level = 10 : i32, message = "bqk,bkd->bqd"}> : () -> ()
    %cst_80 = arith.constant dense<0.000000e+00> : vector<2x8x8xf32>
    %238 = tpu.matmul %237, %220, %cst_80 {dimension_numbers = #tpu.dot_dimension_numbers<[2], [1], [1], [2], [0, 0, 0, 1, 1, 2], [0], [0]>} : vector<2x8x16xbf16>, vector<2x16x8xbf16>, vector<2x8x8xf32> -> vector<2x8x8xf32>
    "tpu.trace_stop"() : () -> ()
    %239 = vector.shape_cast %236 : vector<2x8x16xf32> to vector<2x1x8x16xf32>
    %240 = vector.extract_strided_slice %163 {offsets = [0, 0, 24], sizes = [2, 8, 8], strides = [1, 1, 1]} : vector<2x8x32xf32> to vector<2x8x8xf32>
    %241 = arith.truncf %240 : vector<2x8x8xf32> to vector<2x8x8xbf16>
    %242 = vector.extract_strided_slice %164 {offsets = [0, 0, 24], sizes = [2, 16, 8], strides = [1, 1, 1]} : vector<2x16x64xf32> to vector<2x16x8xf32>
    %243 = arith.truncf %242 : vector<2x16x8xf32> to vector<2x16x8xbf16>
    %244 = vector.extract_strided_slice %164 {offsets = [0, 0, 56], sizes = [2, 16, 8], strides = [1, 1, 1]} : vector<2x16x64xf32> to vector<2x16x8xf32>
    %245 = arith.truncf %244 : vector<2x16x8xf32> to vector<2x16x8xbf16>
    "tpu.trace_start"() <{level = 10 : i32, message = "bqd,bkd->bqk"}> : () -> ()
    %cst_81 = arith.constant dense<0.000000e+00> : vector<2x8x16xf32>
    %246 = tpu.matmul %241, %243, %cst_81 {dimension_numbers = #tpu.dot_dimension_numbers<[2], [2], [1], [1], [0, 0, 0, 1, 1, 1], [0], [0]>} : vector<2x8x8xbf16>, vector<2x16x8xbf16>, vector<2x8x16xf32> -> vector<2x8x16xf32>
    "tpu.trace_stop"() : () -> ()
    %cst_82 = arith.constant 0.353553385 : f32
    %247 = vector.broadcast %cst_82 : f32 to vector<2x8x16xf32>
    %248 = arith.mulf %246, %247 : vector<2x8x16xf32>
    %249 = vector.broadcast %15 : vector<2x1x16xf32> to vector<2x8x16xf32>
    %250 = arith.addf %248, %249 : vector<2x8x16xf32>
    %cst_83 = arith.constant dense<0xFF800000> : vector<2x8xf32>
    %251 = vector.multi_reduction <maximumf>, %250, %cst_83 [2] : vector<2x8x16xf32> to vector<2x8xf32>
    %252 = vector.shape_cast %251 : vector<2x8xf32> to vector<2x8x1xf32>
    %253 = vector.broadcast %252 : vector<2x8x1xf32> to vector<2x8x16xf32>
    %254 = arith.subf %250, %253 : vector<2x8x16xf32>
    %255 = math.exp %254 : vector<2x8x16xf32>
    %cst_84 = arith.constant dense<0.000000e+00> : vector<2x8xf32>
    %256 = vector.multi_reduction <add>, %255, %cst_84 [2] : vector<2x8x16xf32> to vector<2x8xf32>
    %257 = vector.shape_cast %256 : vector<2x8xf32> to vector<2x8x1xf32>
    %cst_85 = arith.constant 1.000000e+00 : f32
    %258 = vector.broadcast %cst_85 : f32 to vector<2x8x1xf32>
    %259 = arith.divf %258, %257 : vector<2x8x1xf32>
    %260 = vector.broadcast %259 : vector<2x8x1xf32> to vector<2x8x16xf32>
    %261 = arith.mulf %255, %260 : vector<2x8x16xf32>
    %262 = arith.truncf %261 : vector<2x8x16xf32> to vector<2x8x16xbf16>
    "tpu.trace_start"() <{level = 10 : i32, message = "bqk,bkd->bqd"}> : () -> ()
    %cst_86 = arith.constant dense<0.000000e+00> : vector<2x8x8xf32>
    %263 = tpu.matmul %262, %245, %cst_86 {dimension_numbers = #tpu.dot_dimension_numbers<[2], [1], [1], [2], [0, 0, 0, 1, 1, 2], [0], [0]>} : vector<2x8x16xbf16>, vector<2x16x8xbf16>, vector<2x8x8xf32> -> vector<2x8x8xf32>
    "tpu.trace_stop"() : () -> ()
    %264 = vector.shape_cast %261 : vector<2x8x16xf32> to vector<2x1x8x16xf32>
    %265 = tpu.concatenate %188, %213, %238, %263 in 2 : vector<2x8x8xf32>, vector<2x8x8xf32>, vector<2x8x8xf32>, vector<2x8x8xf32> -> vector<2x8x32xf32>
    %266 = vector.shape_cast %265 : vector<2x8x32xf32> to vector<16x32xf32>
    %267 = tpu.concatenate %189, %214, %239, %264 in 1 : vector<2x1x8x16xf32>, vector<2x1x8x16xf32>, vector<2x1x8x16xf32>, vector<2x1x8x16xf32> -> vector<2x4x8x16xf32>
    %c96 = arith.constant 96 : index
    %c0_87 = arith.constant 0 : index
    %268 = vector.load %arg5[%c96, %c0_87] : memref<224x128xbf16, #tpu.memory_space<vmem>>, vector<32x32xbf16>
    %269 = arith.truncf %266 : vector<16x32xf32> to vector<16x32xbf16>
    %cst_88 = arith.constant dense<0.000000e+00> : vector<16x32xf32>
    %270 = tpu.matmul %269, %268, %cst_88 {dimension_numbers = #tpu.dot_dimension_numbers<[1], [0], [0], [1], [0, 0, 1, 1], [], []>} : vector<16x32xbf16>, vector<32x32xbf16>, vector<16x32xf32> -> vector<16x32xf32>
    %c3 = arith.constant 3 : index
    %c0_89 = arith.constant 0 : index
    %271 = vector.load %arg6[%c3, %c0_89] : memref<16x128xf32, #tpu.memory_space<vmem>>, vector<1x32xf32>
    %272 = vector.broadcast %271 : vector<1x32xf32> to vector<16x32xf32>
    %273 = arith.addf %270, %272 : vector<16x32xf32>
    %274 = arith.addf %150, %273 : vector<16x32xf32>
    %cst_90 = arith.constant dense<0.000000e+00> : vector<16xf32>
    %275 = vector.multi_reduction <add>, %274, %cst_90 [1] : vector<16x32xf32> to vector<16xf32>
    %276 = vector.shape_cast %275 : vector<16xf32> to vector<16x1xf32>
    %cst_91 = arith.constant 3.200000e+01 : f32
    %277 = vector.broadcast %cst_91 : f32 to vector<16x1xf32>
    %278 = arith.divf %276, %277 : vector<16x1xf32>
    %279 = vector.broadcast %278 : vector<16x1xf32> to vector<16x32xf32>
    %280 = arith.subf %274, %279 : vector<16x32xf32>
    %281 = arith.mulf %280, %280 : vector<16x32xf32>
    %cst_92 = arith.constant dense<0.000000e+00> : vector<16xf32>
    %282 = vector.multi_reduction <add>, %281, %cst_92 [1] : vector<16x32xf32> to vector<16xf32>
    %283 = vector.shape_cast %282 : vector<16xf32> to vector<16x1xf32>
    %cst_93 = arith.constant 3.200000e+01 : f32
    %284 = vector.broadcast %cst_93 : f32 to vector<16x1xf32>
    %285 = arith.divf %283, %284 : vector<16x1xf32>
    %286 = vector.broadcast %278 : vector<16x1xf32> to vector<16x32xf32>
    %287 = arith.subf %274, %286 : vector<16x32xf32>
    %cst_94 = arith.constant 9.99999974E-6 : f32
    %288 = vector.broadcast %cst_94 : f32 to vector<16x1xf32>
    %289 = arith.addf %285, %288 : vector<16x1xf32>
    %290 = math.rsqrt %289 : vector<16x1xf32>
    %291 = vector.broadcast %290 : vector<16x1xf32> to vector<16x32xf32>
    %292 = arith.mulf %287, %291 : vector<16x32xf32>
    %c7 = arith.constant 7 : index
    %c0_95 = arith.constant 0 : index
    %293 = vector.load %arg6[%c7, %c0_95] : memref<16x128xf32, #tpu.memory_space<vmem>>, vector<1x32xf32>
    %294 = vector.broadcast %293 : vector<1x32xf32> to vector<16x32xf32>
    %295 = arith.mulf %292, %294 : vector<16x32xf32>
    %c10 = arith.constant 10 : index
    %c0_96 = arith.constant 0 : index
    %296 = vector.load %arg6[%c10, %c0_96] : memref<16x128xf32, #tpu.memory_space<vmem>>, vector<1x32xf32>
    %297 = vector.broadcast %296 : vector<1x32xf32> to vector<16x32xf32>
    %298 = arith.addf %295, %297 : vector<16x32xf32>
    %cst_97 = arith.constant 0.000000e+00 : f32
    %299 = vector.broadcast %cst_97 : f32 to vector<2x4x8x112xf32>
    %300 = tpu.concatenate %267, %299 in 3 : vector<2x4x8x16xf32>, vector<2x4x8x112xf32> -> vector<2x4x8x128xf32>
    %c0_98 = arith.constant 0 : index
    %c0_99 = arith.constant 0 : index
    %c0_100 = arith.constant 0 : index
    %c0_101 = arith.constant 0 : index
    %301 = vector.load %arg8[%c0_98, %c0_99, %c0_100, %c0_101] : memref<2x4x8x128xf32, #tpu.memory_space<vmem>>, vector<2x4x8x128xf32>
    tpu.vector_store %arg8[%c0_98, %c0_99, %c0_100, %c0_101], %300 {strides = array<i32>} : memref<2x4x8x128xf32, #tpu.memory_space<vmem>>, vector<2x4x8x128xf32>,
    %c128 = arith.constant 128 : index
    %c0_102 = arith.constant 0 : index
    %302 = vector.load %arg5[%c128, %c0_102] : memref<224x128xbf16, #tpu.memory_space<vmem>>, vector<32x64xbf16>
    %303 = arith.truncf %298 : vector<16x32xf32> to vector<16x32xbf16>
    %cst_103 = arith.constant dense<0.000000e+00> : vector<16x64xf32>
    %304 = tpu.matmul %303, %302, %cst_103 {dimension_numbers = #tpu.dot_dimension_numbers<[1], [0], [0], [1], [0, 0, 1, 1], [], []>} : vector<16x32xbf16>, vector<32x64xbf16>, vector<16x64xf32> -> vector<16x64xf32>
    %c4 = arith.constant 4 : index
    %c0_104 = arith.constant 0 : index
    %305 = vector.load %arg6[%c4, %c0_104] : memref<16x128xf32, #tpu.memory_space<vmem>>, vector<1x64xf32>
    %306 = vector.broadcast %305 : vector<1x64xf32> to vector<16x64xf32>
    %307 = arith.addf %304, %306 : vector<16x64xf32>
    %cst_105 = arith.constant 0.000000e+00 : f32
    %308 = vector.broadcast %cst_105 : f32 to vector<16x64xf32>
    %309 = arith.maximumf %307, %308 : vector<16x64xf32>
    %c160 = arith.constant 160 : index
    %c0_106 = arith.constant 0 : index
    %310 = vector.load %arg5[%c160, %c0_106] : memref<224x128xbf16, #tpu.memory_space<vmem>>, vector<64x32xbf16>
    %311 = arith.truncf %309 : vector<16x64xf32> to vector<16x64xbf16>
    %cst_107 = arith.constant dense<0.000000e+00> : vector<16x32xf32>
    %312 = tpu.matmul %311, %310, %cst_107 {dimension_numbers = #tpu.dot_dimension_numbers<[1], [0], [0], [1], [0, 0, 1, 1], [], []>} : vector<16x64xbf16>, vector<64x32xbf16>, vector<16x32xf32> -> vector<16x32xf32>
    %c5 = arith.constant 5 : index
    %c0_108 = arith.constant 0 : index
    %313 = vector.load %arg6[%c5, %c0_108] : memref<16x128xf32, #tpu.memory_space<vmem>>, vector<1x32xf32>
    %314 = vector.broadcast %313 : vector<1x32xf32> to vector<16x32xf32>
    %315 = arith.addf %312, %314 : vector<16x32xf32>
    %316 = arith.addf %298, %315 : vector<16x32xf32>
    %cst_109 = arith.constant dense<0.000000e+00> : vector<16xf32>
    %317 = vector.multi_reduction <add>, %316, %cst_109 [1] : vector<16x32xf32> to vector<16xf32>
    %318 = vector.shape_cast %317 : vector<16xf32> to vector<16x1xf32>
    %cst_110 = arith.constant 3.200000e+01 : f32
    %319 = vector.broadcast %cst_110 : f32 to vector<16x1xf32>
    %320 = arith.divf %318, %319 : vector<16x1xf32>
    %321 = vector.broadcast %320 : vector<16x1xf32> to vector<16x32xf32>
    %322 = arith.subf %316, %321 : vector<16x32xf32>
    %323 = arith.mulf %322, %322 : vector<16x32xf32>
    %cst_111 = arith.constant dense<0.000000e+00> : vector<16xf32>
    %324 = vector.multi_reduction <add>, %323, %cst_111 [1] : vector<16x32xf32> to vector<16xf32>
    %325 = vector.shape_cast %324 : vector<16xf32> to vector<16x1xf32>
    %cst_112 = arith.constant 3.200000e+01 : f32
    %326 = vector.broadcast %cst_112 : f32 to vector<16x1xf32>
    %327 = arith.divf %325, %326 : vector<16x1xf32>
    %328 = vector.broadcast %320 : vector<16x1xf32> to vector<16x32xf32>
    %329 = arith.subf %316, %328 : vector<16x32xf32>
    %cst_113 = arith.constant 9.99999974E-6 : f32
    %330 = vector.broadcast %cst_113 : f32 to vector<16x1xf32>
    %331 = arith.addf %327, %330 : vector<16x1xf32>
    %332 = math.rsqrt %331 : vector<16x1xf32>
    %333 = vector.broadcast %332 : vector<16x1xf32> to vector<16x32xf32>
    %334 = arith.mulf %329, %333 : vector<16x32xf32>
    %c8 = arith.constant 8 : index
    %c0_114 = arith.constant 0 : index
    %335 = vector.load %arg6[%c8, %c0_114] : memref<16x128xf32, #tpu.memory_space<vmem>>, vector<1x32xf32>
    %336 = vector.broadcast %335 : vector<1x32xf32> to vector<16x32xf32>
    %337 = arith.mulf %334, %336 : vector<16x32xf32>
    %c11 = arith.constant 11 : index
    %c0_115 = arith.constant 0 : index
    %338 = vector.load %arg6[%c11, %c0_115] : memref<16x128xf32, #tpu.memory_space<vmem>>, vector<1x32xf32>
    %339 = vector.broadcast %338 : vector<1x32xf32> to vector<16x32xf32>
    %340 = arith.addf %337, %339 : vector<16x32xf32>
    %341 = vector.shape_cast %340 : vector<16x32xf32> to vector<2x8x32xf32>
    %c0_116 = arith.constant 0 : index
    %c0_117 = arith.constant 0 : index
    %c0_118 = arith.constant 0 : index
    %342 = vector.load %arg7[%c0_116, %c0_117, %c0_118] : memref<2x8x32xf32, #tpu.memory_space<vmem>>, vector<2x8x32xf32>
    tpu.vector_store %arg7[%c0_116, %c0_117, %c0_118], %341 {strides = array<i32>} : memref<2x8x32xf32, #tpu.memory_space<vmem>>, vector<2x8x32xf32>,
    return
  }
  func.func @transform_0(%arg0: i32) -> (i32, i32, i32) {
    %c0_i32 = arith.constant 0 : i32
    %c0_i32_0 = arith.constant 0 : i32
    %c0_i32_1 = arith.constant 0 : i32
    return %arg0, %c0_i32, %c0_i32_0 : i32, i32, i32
  }
  func.func @transform_1(%arg0: i32) -> (i32, i32, i32) {
    %c0_i32 = arith.constant 0 : i32
    %c0_i32_0 = arith.constant 0 : i32
    %c0_i32_1 = arith.constant 0 : i32
    return %arg0, %c0_i32, %c0_i32_0 : i32, i32, i32
  }
  func.func @transform_2(%arg0: i32) -> (i32, i32, i32) {
    %c0_i32 = arith.constant 0 : i32
    %c0_i32_0 = arith.constant 0 : i32
    %c0_i32_1 = arith.constant 0 : i32
    return %arg0, %c0_i32, %c0_i32_0 : i32, i32, i32
  }
  func.func @transform_3(%arg0: i32) -> (i32, i32, i32) {
    %c0_i32 = arith.constant 0 : i32
    %c0_i32_0 = arith.constant 0 : i32
    %c0_i32_1 = arith.constant 0 : i32
    return %arg0, %c0_i32, %c0_i32_0 : i32, i32, i32
  }
  func.func @transform_4(%arg0: i32) -> (i32, i32) {
    %c0_i32 = arith.constant 0 : i32
    %c0_i32_0 = arith.constant 0 : i32
    %c0_i32_1 = arith.constant 0 : i32
    return %c0_i32, %c0_i32_0 : i32, i32
  }
  func.func @transform_5(%arg0: i32) -> (i32, i32) {
    %c0_i32 = arith.constant 0 : i32
    %c0_i32_0 = arith.constant 0 : i32
    %c0_i32_1 = arith.constant 0 : i32
    return %c0_i32, %c0_i32_0 : i32, i32
  }
  func.func @transform_6(%arg0: i32) -> (i32, i32, i32) {
    %c0_i32 = arith.constant 0 : i32
    %c0_i32_0 = arith.constant 0 : i32
    %c0_i32_1 = arith.constant 0 : i32
    return %arg0, %c0_i32, %c0_i32_0 : i32, i32, i32
  }
  func.func @transform_7(%arg0: i32) -> (i32, i32, i32, i32) {
    %c0_i32 = arith.constant 0 : i32
    %c0_i32_0 = arith.constant 0 : i32
    %c0_i32_1 = arith.constant 0 : i32
    %c0_i32_2 = arith.constant 0 : i32
    return %arg0, %c0_i32, %c0_i32_0, %c0_i32_1 : i32, i32, i32, i32
  }
}

</mosaic_0001>

<llo_original>
// kernel: _decoder_layer.1
$region0: #{_decoder_layer.1}
  #allocation0 [shape = 'u32[]', space=smem, size = 0x4, offset = 0x4, fixed_abs, tag = 'smem constant byte address 0x4 - core index']
  #allocation1 [shape = 'u32[72,128]{1,0:T(1,128)}', space=vmem, size = 0x9000, scoped, tag = 'internal scratch']
  %s0 = inlined_call_operand.hbm [shape: f32[2,8,32], index: 0, kind: input, shape index: {}]
  %s1 = inlined_call_operand.vmem [shape: f32[2,16,32], index: 1, kind: input, shape index: {}]
  %s2 = inlined_call_operand.hbm [shape: f32[2,8,8], index: 2, kind: input, shape index: {}]
  %s3 = inlined_call_operand.vmem [shape: f32[2,1,16], index: 3, kind: input, shape index: {}]
  %s4 = inlined_call_operand.vmem [shape: bf16[224,128], index: 4, kind: input, shape index: {}]
  %s5 = inlined_call_operand.hbm [shape: f32[16,128], index: 5, kind: input, shape index: {}]
  %s6 = inlined_call_operand.hbm [shape: f32[2,8,32], index: 6, kind: output, shape index: {0}]
  %s7 = inlined_call_operand.hbm [shape: f32[2,4,8,128], index: 7, kind: output, shape index: {1}]
  %8 = xla_tuple %s6, %s7
  %s9 = sld [smem:[#allocation0]]
  $region54: #{_decoder_layer.1} parent=0
    _
  %s11 = ssub.s32 1, %s9
  %s12 = scalar_select 0, %s11, %s9
  $region1: #{_decoder_layer.1} parent=0
    #allocation2 [shape = 'u8[8192]{0}', space=vmem, size = 0x2000, scoped, tag = 'input window, operand 0, single buffered']
    #allocation3 [shape = 's32[1]{0}', space=sflag, size = 0x4, scoped, tag = 'scoped memory for _decoder_layer.1']
    #allocation4 [shape = 's32[1]{0}', space=sflag, size = 0x4, scoped, tag = 'scoped memory for _decoder_layer.1']
    #allocation5 [shape = 'u8[8192]{0}', space=vmem, size = 0x2000, scoped, tag = 'input window, operand 2, single buffered']
    #allocation6 [shape = 's32[1]{0}', space=sflag, size = 0x4, scoped, tag = 'scoped memory for _decoder_layer.1']
    #allocation7 [shape = 'u8[8192]{0}', space=vmem, size = 0x2000, scoped, tag = 'input window, operand 5, single buffered']
    #allocation8 [shape = 'u8[8192]{0}', space=vmem, size = 0x2000, scoped, tag = 'output window, operand 0, single buffered']
    #allocation9 [shape = 'u8[32768]{0}', space=vmem, size = 0x8000, scoped, tag = 'output window, operand 1, single buffered']
    #allocation10 [shape = 's32[1]{0}', space=sflag, size = 0x4, scoped, tag = 'scoped memory for _decoder_layer.1']
    %13 = vsyncpa [#allocation3], 0
    %14 = vsyncpa [#allocation6], 0
    %15 = vsyncpa [#allocation4], 0
    %16 = vsyncpa [#allocation10], 0
    // Predicated region
    $region2: #{_decoder_layer.1} parent=1 // pred_check
      _
    $region3: #{_decoder_layer.1} parent=1 // pred_check_branch
      %18 = sbr.rel (0) target = $region5
    $region4: #{_decoder_layer.1} parent=1 // pred_region
      %20 = vsyncadd [#allocation3], 0
      %s21 = sshll.u32 %s0, 4
      %s22 = int_to_ptr.hbm [resolvable:$true] %s21
      %s23 = sshll.u32 [#allocation2], 4
      %s24 = int_to_ptr.vmem [resolvable:$true] %s23
      %29 = dma.hbm_to_vmem [thread:$0]  %s22, 256, %s24, [#allocation3], 128, 128, 8
    $region5: #{_decoder_layer.1} parent=1 // pred_fallthru
      _
    // Predicated region
    $region6: #{_decoder_layer.1} parent=1 // pred_check
      _
    $region7: #{_decoder_layer.1} parent=1 // pred_check_branch
      %31 = sbr.rel (0) target = $region9
    $region8: #{_decoder_layer.1} parent=1 // pred_region
      _
    $region9: #{_decoder_layer.1} parent=1 // pred_fallthru
      _
    // Predicated region
    $region10: #{_decoder_layer.1} parent=1 // pred_check
      _
    $region11: #{_decoder_layer.1} parent=1 // pred_check_branch
      %33 = sbr.rel (0) target = $region13
    $region12: #{_decoder_layer.1} parent=1 // pred_region
      %35 = vsyncadd [#allocation6], 0
      %s36 = sshll.u32 %s2, 4
      %s37 = int_to_ptr.hbm [resolvable:$true] %s36
      %s38 = sshll.u32 [#allocation5], 4
      %s39 = int_to_ptr.vmem [resolvable:$true] %s38
      %44 = dma.hbm_to_vmem [thread:$0]  %s37, 256, %s39, [#allocation6], 128, 128, 8
    $region13: #{_decoder_layer.1} parent=1 // pred_fallthru
      _
    // Predicated region
    $region14: #{_decoder_layer.1} parent=1 // pred_check
      _
    $region15: #{_decoder_layer.1} parent=1 // pred_check_branch
      %46 = sbr.rel (0) target = $region17
    $region16: #{_decoder_layer.1} parent=1 // pred_region
      _
    $region17: #{_decoder_layer.1} parent=1 // pred_fallthru
      _
    // Predicated region
    $region18: #{_decoder_layer.1} parent=1 // pred_check
      _
    $region19: #{_decoder_layer.1} parent=1 // pred_check_branch
      %48 = sbr.rel (0) target = $region21
    $region20: #{_decoder_layer.1} parent=1 // pred_region
      _
    $region21: #{_decoder_layer.1} parent=1 // pred_fallthru
      _
    // Predicated region
    $region22: #{_decoder_layer.1} parent=1 // pred_check
      _
    $region23: #{_decoder_layer.1} parent=1 // pred_check_branch
      %50 = sbr.rel (0) target = $region25
    $region24: #{_decoder_layer.1} parent=1 // pred_region
      %52 = vsyncadd [#allocation6], 0
      %s53 = sshll.u32 %s5, 4
      %s54 = int_to_ptr.hbm [resolvable:$true] %s53
      %s55 = sshll.u32 [#allocation7], 4
      %s56 = int_to_ptr.vmem [resolvable:$true] %s55
      %61 = dma.hbm_to_vmem [thread:$0]  %s54, 256, %s56, [#allocation6], 128, 128, 8
    $region25: #{_decoder_layer.1} parent=1 // pred_fallthru
      _
    // Predicated region
    $region26: #{_decoder_layer.1} parent=1 // pred_check
      _
    $region27: #{_decoder_layer.1} parent=1 // pred_check_branch
      %63 = sbr.rel (0) target = $region29
    $region28: #{_decoder_layer.1} parent=1 // pred_region
      %65 = dma.done [#allocation3], 256
    $region29: #{_decoder_layer.1} parent=1 // pred_fallthru
      _
    // Predicated region
    $region30: #{_decoder_layer.1} parent=1 // pred_check
      _
    $region31: #{_decoder_layer.1} parent=1 // pred_check_branch
      %67 = sbr.rel (0) target = $region33
    $region32: #{_decoder_layer.1} parent=1 // pred_region
      %69 = dma.done [#allocation6], 256
    $region33: #{_decoder_layer.1} parent=1 // pred_fallthru
      _
    // Predicated region
    $region34: #{_decoder_layer.1} parent=1 // pred_check
      _
    $region35: #{_decoder_layer.1} parent=1 // pred_check_branch
      %71 = sbr.rel (0) target = $region37
    $region36: #{_decoder_layer.1} parent=1 // pred_region
      %73 = dma.done [#allocation6], 256
    $region37: #{_decoder_layer.1} parent=1 // pred_fallthru
      _
    %v75 = vld [vmem:[#allocation2] sm:$0xff]
    %v76 = vld [vmem:[#allocation2 + $0x8] sm:$0xff]
    %v77 = vld [vmem:[%s1] sm:$0xff]
    %v78 = vld [vmem:[%s1 + $0x8] sm:$0xff]
    %v79 = vld [vmem:[%s1 + $0x10] sm:$0xff]
    %v80 = vld [vmem:[%s1 + $0x18] sm:$0xff]
    %v81 = vld [vmem:[#allocation5] sm:$0xff]
    %v82 = vld [vmem:[#allocation5 + $0x8] sm:$0xff]
    %vm83 = vcmp.eq.f32.partialorder %v81, 0.0
    %vm84 = vcmp.eq.f32.partialorder %v82, 0.0
    %v85 = vsel %vm83, -1e+10, 0.0
    %v86 = vsel %vm84, -1e+10, 0.0
    %v87 = vld [vmem:[%s3] sm:$0x1]
    %v88 = vld [vmem:[%s3 + $0x1] sm:$0x1]
    %vm89 = vcmp.eq.f32.partialorder %v87, 0.0
    %vm90 = vcmp.eq.f32.partialorder %v88, 0.0
    %v91 = vsel %vm89, -1e+10, 0.0
    %v92 = vsel %vm90, -1e+10, 0.0
    %v93 = vld [vmem:[%s4] sm:$0xf]
    %v94 = vld [vmem:[%s4 + $0x4] sm:$0xf]
    %v95 = vld [vmem:[%s4 + $0x8] sm:$0xf]
    %v96 = vld [vmem:[%s4 + $0xc] sm:$0xf]
    %v97 = vpack.c.bf16 %v76, %v75
    %v98 = vld [vmem:[#allocation7] sm:$0x1]
    %v99 = vperm.slane %v98, 0
    %v104 = vunpack.c.l.b16 %v93
    %v105 = vunpack.c.l.b16 %v94
    %v106 = vunpack.c.l.b16 %v95
    %v107 = vunpack.c.l.b16 %v96
    %v108 = vpack.c.b16 %v105, %v104
    %v109 = vpack.c.b16 %v107, %v106
    %vm112 = vcmask 261120
    %v114 = vsel %vm112, %v97, 0
    %116 = vmatpush.bf16.msra.mxu0 0
    %117 = vmatpush.bf16.msra.mxu0 0
    %118 = vmatpush.bf16.msra.mxu0 0
    %119 = vmatpush.bf16.msra.mxu0 0
    %120 = vmatpush.bf16.msra.mxu0 0
    %121 = vmatpush.bf16.msra.mxu0 0
    %122 = vmatpush.bf16.msra.mxu0 %v109
    %123 = vmatpush.bf16.msra.mxu0 %v108
    %124 = vmatmul.bf16.gmra.mxu0 %v114
    %v125 = vpop.f32.mrf.mxu0
    %v126 = vadd.f32 %v99, %v125
    %v127 = vpop.f32.mrf.mxu0
    %v128 = vadd.f32 %v99, %v127
    %129 = vdwg.mxu0
    %v130 = vpack.c.bf16 %v126, %v126
    %v131 = vpack.c.bf16 %v128, %v128
    %v133 = vunpack.c.l.b16 %v130
    %v134 = vpack.c.b16 %v133, %v133
    %135 = vrot.lane.b32.xlu0 %v134, 96
    %v136 = vpop.permute.xlu0 %135
    %vm137 = vcmask 64512
    %v139 = vsel %vm137, %v130, 0
    %v142 = vsel %vm137, %v136, 0
    %144 = vmatpush.bf16.xpose.msra.mxu0 0
    %145 = vmatpush.bf16.xpose.msra.mxu0 0
    %146 = vmatpush.bf16.xpose.msra.mxu0 0
    %147 = vmatpush.bf16.xpose.msra.mxu0 0
    %148 = vmatpush.bf16.xpose.msra.mxu0 0
    %149 = vmatpush.bf16.xpose.msra.mxu0 0
    %150 = vmatpush.bf16.xpose.msra.mxu0 0
    %151 = vmatpush.bf16.xpose.msra.mxu0 %v142
    %152 = vmatmul.bf16.gmra.mxu0 %v139
    %v153 = vpop.f32.mrf.mxu0
    %v154 = vadd.f32 0.0, %v153
    %v155 = vpop.f32.mrf.mxu0
    %156 = vdwg.mxu0
    %v158 = vunpack.c.l.b16 %v131
    %v159 = vpack.c.b16 %v158, %v158
    %160 = vrot.lane.b32.xlu0 %v159, 96
    %v161 = vpop.permute.xlu0 %160
    %v163 = vsel %vm137, %v131, 0
    %v166 = vsel %vm137, %v161, 0
    %168 = vmatpush.bf16.xpose.msra.mxu0 0
    %169 = vmatpush.bf16.xpose.msra.mxu0 0
    %170 = vmatpush.bf16.xpose.msra.mxu0 0
    %171 = vmatpush.bf16.xpose.msra.mxu0 0
    %172 = vmatpush.bf16.xpose.msra.mxu0 0
    %173 = vmatpush.bf16.xpose.msra.mxu0 0
    %174 = vmatpush.bf16.xpose.msra.mxu0 0
    %175 = vmatpush.bf16.xpose.msra.mxu0 %v166
    %176 = vmatmul.bf16.gmra.mxu0 %v163
    %v177 = vpop.f32.mrf.mxu0
    %v178 = vadd.f32 0.0, %v177
    %v179 = vpop.f32.mrf.mxu0
    %180 = vdwg.mxu0
    %v181 = vmul.f32 %v154, 0.35355338
    %v182 = vmul.f32 %v178, 0.35355338
    %v183 = vadd.f32 %v181, %v85
    %v184 = vadd.f32 %v182, %v86
    %v185 = vsel %vm137, %v183, -inf
    %186 = vmax.xlane.f32.xlu0 %v185
    %v187 = vpop.xlane.xlu0 %186
    %v188 = vsel %vm137, %v184, -inf
    %189 = vmax.xlane.f32.xlu0 %v188
    %v190 = vpop.xlane.xlu0 %189
    %v191 = vsub.f32 %v183, %v187
    %v192 = vsub.f32 %v184, %v190
    %v193 = vmul.f32 %v191, 1.442695
    %v194 = vpow.pop %v193
    %v195 = vmul.f32 %v192, 1.442695
    %v196 = vpow.pop %v195
    %v197 = vsel %vm137, %v194, 0.0
    %198 = vadd.xlane.f32.xlu0 %v197
    %v199 = vpop.xlane.xlu0 %198
    %v200 = vsel %vm137, %v196, 0.0
    %201 = vadd.xlane.f32.xlu0 %v200
    %v202 = vpop.xlane.xlu0 %201
    %v203 = vrcp.pop %v199
    %v204 = vmul.f32 %v199, %v203
    %v205 = vsub.f32 1.0, %v204
    %v206 = vmul.f32 %v203, %v205
    %v207 = vadd.f32 %v203, %v206
    %vm208 = vweird.f32 %v199
    %vm209 = vweird.f32 %v203
    %vm210 = vmor %vm208, %vm209
    %v211 = vsel %vm210, %v203, %v207
    %v212 = vand.u32 2147483647, %v199
    %vm213 = vcmp.eq.f32.partialorder %v212, 8.507059e+37
    %v214 = vand.u32 %v199, 2147483648
    %v215 = vor.u32 1.1754944e-38, %v214
    %v216 = vsel %vm213, %v215, %v211
    %v217 = vmul.f32 1.0, %v216
    %v218 = vrcp.pop %v202
    %v219 = vmul.f32 %v202, %v218
    %v220 = vsub.f32 1.0, %v219
    %v221 = vmul.f32 %v218, %v220
    %v222 = vadd.f32 %v218, %v221
    %vm223 = vweird.f32 %v202
    %vm224 = vweird.f32 %v218
    %vm225 = vmor %vm223, %vm224
    %v226 = vsel %vm225, %v218, %v222
    %v227 = vand.u32 2147483647, %v202
    %vm228 = vcmp.eq.f32.partialorder %v227, 8.507059e+37
    %v229 = vand.u32 %v202, 2147483648
    %v230 = vor.u32 1.1754944e-38, %v229
    %v231 = vsel %vm228, %v230, %v226
    %v232 = vmul.f32 1.0, %v231
    %v233 = vmul.f32 %v194, %v217
    %v234 = vmul.f32 %v196, %v232
    %v235 = vpack.c.bf16 %v233, %v233
    %v236 = vpack.c.bf16 %v234, %v234
    %237 = vrot.lane.b32.xlu0 %v134, 64
    %v238 = vpop.permute.xlu0 %237
    %v240 = vsel %vm137, %v235, 0
    %vm242 = vcmask 1043456
    %v244 = vsel %vm242, %v238, 0
    %246 = vmatpush.bf16.msra.mxu0 0
    %247 = vmatpush.bf16.msra.mxu0 0
    %248 = vmatpush.bf16.msra.mxu0 0
    %249 = vmatpush.bf16.msra.mxu0 0
    %250 = vmatpush.bf16.msra.mxu0 0
    %251 = vmatpush.bf16.msra.mxu0 0
    %252 = vmatpush.bf16.msra.mxu0 0
    %253 = vmatpush.bf16.msra.mxu0 %v244
    %254 = vmatmul.bf16.gmra.mxu0 %v240
    %v255 = vpop.f32.mrf.mxu0
    %v256 = vadd.f32 0.0, %v255
    %v257 = vpop.f32.mrf.mxu0
    %258 = vdwg.mxu0
    %259 = vrot.lane.b32.xlu0 %v159, 64
    %v260 = vpop.permute.xlu0 %259
    %v262 = vsel %vm137, %v236, 0
    %v265 = vsel %vm242, %v260, 0
    %267 = vmatpush.bf16.msra.mxu0 0
    %268 = vmatpush.bf16.msra.mxu0 0
    %269 = vmatpush.bf16.msra.mxu0 0
    %270 = vmatpush.bf16.msra.mxu0 0
    %271 = vmatpush.bf16.msra.mxu0 0
    %272 = vmatpush.bf16.msra.mxu0 0
    %273 = vmatpush.bf16.msra.mxu0 0
    %274 = vmatpush.bf16.msra.mxu0 %v265
    %275 = vmatmul.bf16.gmra.mxu0 %v262
    %v276 = vpop.f32.mrf.mxu0
    %v277 = vadd.f32 0.0, %v276
    %v278 = vpop.f32.mrf.mxu0
    %279 = vdwg.mxu0
    %280 = vrot.lane.b32.xlu0 %v134, 120
    %v281 = vpop.permute.xlu0 %280
    %282 = vrot.lane.b32.xlu0 %v134, 88
    %v283 = vpop.permute.xlu0 %282
    %v285 = vsel %vm137, %v281, 0
    %v288 = vsel %vm137, %v283, 0
    %290 = vmatpush.bf16.xpose.msra.mxu0 0
    %291 = vmatpush.bf16.xpose.msra.mxu0 0
    %292 = vmatpush.bf16.xpose.msra.mxu0 0
    %293 = vmatpush.bf16.xpose.msra.mxu0 0
    %294 = vmatpush.bf16.xpose.msra.mxu0 0
    %295 = vmatpush.bf16.xpose.msra.mxu0 0
    %296 = vmatpush.bf16.xpose.msra.mxu0 0
    %297 = vmatpush.bf16.xpose.msra.mxu0 %v288
    %298 = vmatmul.bf16.gmra.mxu0 %v285
    %v299 = vpop.f32.mrf.mxu0
    %v300 = vadd.f32 0.0, %v299
    %v301 = vpop.f32.mrf.mxu0
    %302 = vdwg.mxu0
    %303 = vrot.lane.b32.xlu0 %v159, 120
    %v304 = vpop.permute.xlu0 %303
    %305 = vrot.lane.b32.xlu0 %v159, 88
    %v306 = vpop.permute.xlu0 %305
    %v308 = vsel %vm137, %v304, 0
    %v311 = vsel %vm137, %v306, 0
    %313 = vmatpush.bf16.xpose.msra.mxu0 0
    %314 = vmatpush.bf16.xpose.msra.mxu0 0
    %315 = vmatpush.bf16.xpose.msra.mxu0 0
    %316 = vmatpush.bf16.xpose.msra.mxu0 0
    %317 = vmatpush.bf16.xpose.msra.mxu0 0
    %318 = vmatpush.bf16.xpose.msra.mxu0 0
    %319 = vmatpush.bf16.xpose.msra.mxu0 0
    %320 = vmatpush.bf16.xpose.msra.mxu0 %v311
    %321 = vmatmul.bf16.gmra.mxu0 %v308
    %v322 = vpop.f32.mrf.mxu0
    %v323 = vadd.f32 0.0, %v322
    %v324 = vpop.f32.mrf.mxu0
    %325 = vdwg.mxu0
    %v326 = vmul.f32 %v300, 0.35355338
    %v327 = vmul.f32 %v323, 0.35355338
    %v328 = vadd.f32 %v326, %v85
    %v329 = vadd.f32 %v327, %v86
    %v330 = vsel %vm137, %v328, -inf
    %331 = vmax.xlane.f32.xlu0 %v330
    %v332 = vpop.xlane.xlu0 %331
    %v333 = vsel %vm137, %v329, -inf
    %334 = vmax.xlane.f32.xlu0 %v333
    %v335 = vpop.xlane.xlu0 %334
    %v336 = vsub.f32 %v328, %v332
    %v337 = vsub.f32 %v329, %v335
    %v338 = vmul.f32 %v336, 1.442695
    %v339 = vpow.pop %v338
    %v340 = vmul.f32 %v337, 1.442695
    %v341 = vpow.pop %v340
    %v342 = vsel %vm137, %v339, 0.0
    %343 = vadd.xlane.f32.xlu0 %v342
    %v344 = vpop.xlane.xlu0 %343
    %v345 = vsel %vm137, %v341, 0.0
    %346 = vadd.xlane.f32.xlu0 %v345
    %v347 = vpop.xlane.xlu0 %346
    %v348 = vrcp.pop %v344
    %v349 = vmul.f32 %v344, %v348
    %v350 = vsub.f32 1.0, %v349
    %v351 = vmul.f32 %v348, %v350
    %v352 = vadd.f32 %v348, %v351
    %vm353 = vweird.f32 %v344
    %vm354 = vweird.f32 %v348
    %vm355 = vmor %vm353, %vm354
    %v356 = vsel %vm355, %v348, %v352
    %v357 = vand.u32 2147483647, %v344
    %vm358 = vcmp.eq.f32.partialorder %v357, 8.507059e+37
    %v359 = vand.u32 %v344, 2147483648
    %v360 = vor.u32 1.1754944e-38, %v359
    %v361 = vsel %vm358, %v360, %v356
    %v362 = vmul.f32 1.0, %v361
    %v363 = vrcp.pop %v347
    %v364 = vmul.f32 %v347, %v363
    %v365 = vsub.f32 1.0, %v364
    %v366 = vmul.f32 %v363, %v365
    %v367 = vadd.f32 %v363, %v366
    %vm368 = vweird.f32 %v347
    %vm369 = vweird.f32 %v363
    %vm370 = vmor %vm368, %vm369
    %v371 = vsel %vm370, %v363, %v367
    %v372 = vand.u32 2147483647, %v347
    %vm373 = vcmp.eq.f32.partialorder %v372, 8.507059e+37
    %v374 = vand.u32 %v347, 2147483648
    %v375 = vor.u32 1.1754944e-38, %v374
    %v376 = vsel %vm373, %v375, %v371
    %v377 = vmul.f32 1.0, %v376
    %v378 = vmul.f32 %v339, %v362
    %v379 = vmul.f32 %v341, %v377
    %v380 = vpack.c.bf16 %v378, %v378
    %v381 = vpack.c.bf16 %v379, %v379
    %382 = vrot.lane.b32.xlu0 %v134, 56
    %v383 = vpop.permute.xlu0 %382
    %v385 = vsel %vm137, %v380, 0
    %v388 = vsel %vm242, %v383, 0
    %390 = vmatpush.bf16.msra.mxu0 0
    %391 = vmatpush.bf16.msra.mxu0 0
    %392 = vmatpush.bf16.msra.mxu0 0
    %393 = vmatpush.bf16.msra.mxu0 0
    %394 = vmatpush.bf16.msra.mxu0 0
    %395 = vmatpush.bf16.msra.mxu0 0
    %396 = vmatpush.bf16.msra.mxu0 0
    %397 = vmatpush.bf16.msra.mxu0 %v388
    %398 = vmatmul.bf16.gmra.mxu0 %v385
    %v399 = vpop.f32.mrf.mxu0
    %v400 = vadd.f32 0.0, %v399
    %v401 = vpop.f32.mrf.mxu0
    %402 = vdwg.mxu0
    %403 = vrot.lane.b32.xlu0 %v159, 56
    %v404 = vpop.permute.xlu0 %403
    %v406 = vsel %vm137, %v381, 0
    %v409 = vsel %vm242, %v404, 0
    %411 = vmatpush.bf16.msra.mxu0 0
    %412 = vmatpush.bf16.msra.mxu0 0
    %413 = vmatpush.bf16.msra.mxu0 0
    %414 = vmatpush.bf16.msra.mxu0 0
    %415 = vmatpush.bf16.msra.mxu0 0
    %416 = vmatpush.bf16.msra.mxu0 0
    %417 = vmatpush.bf16.msra.mxu0 0
    %418 = vmatpush.bf16.msra.mxu0 %v409
    %419 = vmatmul.bf16.gmra.mxu0 %v406
    %v420 = vpop.f32.mrf.mxu0
    %v421 = vadd.f32 0.0, %v420
    %v422 = vpop.f32.mrf.mxu0
    %423 = vdwg.mxu0
    %424 = vrot.lane.b32.xlu0 %v134, 112
    %v425 = vpop.permute.xlu0 %424
    %426 = vrot.lane.b32.xlu0 %v134, 80
    %v427 = vpop.permute.xlu0 %426
    %v429 = vsel %vm137, %v425, 0
    %v432 = vsel %vm137, %v427, 0
    %434 = vmatpush.bf16.xpose.msra.mxu0 0
    %435 = vmatpush.bf16.xpose.msra.mxu0 0
    %436 = vmatpush.bf16.xpose.msra.mxu0 0
    %437 = vmatpush.bf16.xpose.msra.mxu0 0
    %438 = vmatpush.bf16.xpose.msra.mxu0 0
    %439 = vmatpush.bf16.xpose.msra.mxu0 0
    %440 = vmatpush.bf16.xpose.msra.mxu0 0
    %441 = vmatpush.bf16.xpose.msra.mxu0 %v432
    %442 = vmatmul.bf16.gmra.mxu0 %v429
    %v443 = vpop.f32.mrf.mxu0
    %v444 = vadd.f32 0.0, %v443
    %v445 = vpop.f32.mrf.mxu0
    %446 = vdwg.mxu0
    %447 = vrot.lane.b32.xlu0 %v159, 112
    %v448 = vpop.permute.xlu0 %447
    %449 = vrot.lane.b32.xlu0 %v159, 80
    %v450 = vpop.permute.xlu0 %449
    %v452 = vsel %vm137, %v448, 0
    %v455 = vsel %vm137, %v450, 0
    %457 = vmatpush.bf16.xpose.msra.mxu0 0
    %458 = vmatpush.bf16.xpose.msra.mxu0 0
    %459 = vmatpush.bf16.xpose.msra.mxu0 0
    %460 = vmatpush.bf16.xpose.msra.mxu0 0
    %461 = vmatpush.bf16.xpose.msra.mxu0 0
    %462 = vmatpush.bf16.xpose.msra.mxu0 0
    %463 = vmatpush.bf16.xpose.msra.mxu0 0
    %464 = vmatpush.bf16.xpose.msra.mxu0 %v455
    %465 = vmatmul.bf16.gmra.mxu0 %v452
    %v466 = vpop.f32.mrf.mxu0
    %v467 = vadd.f32 0.0, %v466
    %v468 = vpop.f32.mrf.mxu0
    %469 = vdwg.mxu0
    %v470 = vmul.f32 %v444, 0.35355338
    %v471 = vmul.f32 %v467, 0.35355338
    %v472 = vadd.f32 %v470, %v85
    %v473 = vadd.f32 %v471, %v86
    %v474 = vsel %vm137, %v472, -inf
    %475 = vmax.xlane.f32.xlu0 %v474
    %v476 = vpop.xlane.xlu0 %475
    %v477 = vsel %vm137, %v473, -inf
    %478 = vmax.xlane.f32.xlu0 %v477
    %v479 = vpop.xlane.xlu0 %478
    %v480 = vsub.f32 %v472, %v476
    %v481 = vsub.f32 %v473, %v479
    %v482 = vmul.f32 %v480, 1.442695
    %v483 = vpow.pop %v482
    %v484 = vmul.f32 %v481, 1.442695
    %v485 = vpow.pop %v484
    %v486 = vsel %vm137, %v483, 0.0
    %487 = vadd.xlane.f32.xlu0 %v486
    %v488 = vpop.xlane.xlu0 %487
    %v489 = vsel %vm137, %v485, 0.0
    %490 = vadd.xlane.f32.xlu0 %v489
    %v491 = vpop.xlane.xlu0 %490
    %v492 = vrcp.pop %v488
    %v493 = vmul.f32 %v488, %v492
    %v494 = vsub.f32 1.0, %v493
    %v495 = vmul.f32 %v492, %v494
    %v496 = vadd.f32 %v492, %v495
    %vm497 = vweird.f32 %v488
    %vm498 = vweird.f32 %v492
    %vm499 = vmor %vm497, %vm498
    %v500 = vsel %vm499, %v492, %v496
    %v501 = vand.u32 2147483647, %v488
    %vm502 = vcmp.eq.f32.partialorder %v501, 8.507059e+37
    %v503 = vand.u32 %v488, 2147483648
    %v504 = vor.u32 1.1754944e-38, %v503
    %v505 = vsel %vm502, %v504, %v500
    %v506 = vmul.f32 1.0, %v505
    %v507 = vrcp.pop %v491
    %v508 = vmul.f32 %v491, %v507
    %v509 = vsub.f32 1.0, %v508
    %v510 = vmul.f32 %v507, %v509
    %v511 = vadd.f32 %v507, %v510
    %vm512 = vweird.f32 %v491
    %vm513 = vweird.f32 %v507
    %vm514 = vmor %vm512, %vm513
    %v515 = vsel %vm514, %v507, %v511
    %v516 = vand.u32 2147483647, %v491
    %vm517 = vcmp.eq.f32.partialorder %v516, 8.507059e+37
    %v518 = vand.u32 %v491, 2147483648
    %v519 = vor.u32 1.1754944e-38, %v518
    %v520 = vsel %vm517, %v519, %v515
    %v521 = vmul.f32 1.0, %v520
    %v522 = vmul.f32 %v483, %v506
    %v523 = vmul.f32 %v485, %v521
    %v524 = vpack.c.bf16 %v522, %v522
    %v525 = vpack.c.bf16 %v523, %v523
    %526 = vrot.lane.b32.xlu0 %v134, 48
    %v527 = vpop.permute.xlu0 %526
    %v529 = vsel %vm137, %v524, 0
    %v532 = vsel %vm242, %v527, 0
    %534 = vmatpush.bf16.msra.mxu0 0
    %535 = vmatpush.bf16.msra.mxu0 0
    %536 = vmatpush.bf16.msra.mxu0 0
    %537 = vmatpush.bf16.msra.mxu0 0
    %538 = vmatpush.bf16.msra.mxu0 0
    %539 = vmatpush.bf16.msra.mxu0 0
    %540 = vmatpush.bf16.msra.mxu0 0
    %541 = vmatpush.bf16.msra.mxu0 %v532
    %542 = vmatmul.bf16.gmra.mxu0 %v529
    %v543 = vpop.f32.mrf.mxu0
    %v544 = vadd.f32 0.0, %v543
    %v545 = vpop.f32.mrf.mxu0
    %546 = vdwg.mxu0
    %547 = vrot.lane.b32.xlu0 %v159, 48
    %v548 = vpop.permute.xlu0 %547
    %v550 = vsel %vm137, %v525, 0
    %v553 = vsel %vm242, %v548, 0
    %555 = vmatpush.bf16.msra.mxu0 0
    %556 = vmatpush.bf16.msra.mxu0 0
    %557 = vmatpush.bf16.msra.mxu0 0
    %558 = vmatpush.bf16.msra.mxu0 0
    %559 = vmatpush.bf16.msra.mxu0 0
    %560 = vmatpush.bf16.msra.mxu0 0
    %561 = vmatpush.bf16.msra.mxu0 0
    %562 = vmatpush.bf16.msra.mxu0 %v553
    %563 = vmatmul.bf16.gmra.mxu0 %v550
    %v564 = vpop.f32.mrf.mxu0
    %v565 = vadd.f32 0.0, %v564
    %v566 = vpop.f32.mrf.mxu0
    %567 = vdwg.mxu0
    %568 = vrot.lane.b32.xlu0 %v134, 104
    %v569 = vpop.permute.xlu0 %568
    %570 = vrot.lane.b32.xlu0 %v134, 72
    %v571 = vpop.permute.xlu0 %570
    %v573 = vsel %vm137, %v569, 0
    %v576 = vsel %vm137, %v571, 0
    %578 = vmatpush.bf16.xpose.msra.mxu0 0
    %579 = vmatpush.bf16.xpose.msra.mxu0 0
    %580 = vmatpush.bf16.xpose.msra.mxu0 0
    %581 = vmatpush.bf16.xpose.msra.mxu0 0
    %582 = vmatpush.bf16.xpose.msra.mxu0 0
    %583 = vmatpush.bf16.xpose.msra.mxu0 0
    %584 = vmatpush.bf16.xpose.msra.mxu0 0
    %585 = vmatpush.bf16.xpose.msra.mxu0 %v576
    %586 = vmatmul.bf16.gmra.mxu0 %v573
    %v587 = vpop.f32.mrf.mxu0
    %v588 = vadd.f32 0.0, %v587
    %v589 = vpop.f32.mrf.mxu0
    %590 = vdwg.mxu0
    %591 = vrot.lane.b32.xlu0 %v159, 104
    %v592 = vpop.permute.xlu0 %591
    %593 = vrot.lane.b32.xlu0 %v159, 72
    %v594 = vpop.permute.xlu0 %593
    %v596 = vsel %vm137, %v592, 0
    %v599 = vsel %vm137, %v594, 0
    %601 = vmatpush.bf16.xpose.msra.mxu0 0
    %602 = vmatpush.bf16.xpose.msra.mxu0 0
    %603 = vmatpush.bf16.xpose.msra.mxu0 0
    %604 = vmatpush.bf16.xpose.msra.mxu0 0
    %605 = vmatpush.bf16.xpose.msra.mxu0 0
    %606 = vmatpush.bf16.xpose.msra.mxu0 0
    %607 = vmatpush.bf16.xpose.msra.mxu0 0
    %608 = vmatpush.bf16.xpose.msra.mxu0 %v599
    %609 = vmatmul.bf16.gmra.mxu0 %v596
    %v610 = vpop.f32.mrf.mxu0
    %v611 = vadd.f32 0.0, %v610
    %v612 = vpop.f32.mrf.mxu0
    %613 = vdwg.mxu0
    %v614 = vmul.f32 %v588, 0.35355338
    %v615 = vmul.f32 %v611, 0.35355338
    %v616 = vadd.f32 %v614, %v85
    %v617 = vadd.f32 %v615, %v86
    %v618 = vsel %vm137, %v616, -inf
    %619 = vmax.xlane.f32.xlu0 %v618
    %v620 = vpop.xlane.xlu0 %619
    %v621 = vsel %vm137, %v617, -inf
    %622 = vmax.xlane.f32.xlu0 %v621
    %v623 = vpop.xlane.xlu0 %622
    %v624 = vsub.f32 %v616, %v620
    %v625 = vsub.f32 %v617, %v623
    %v626 = vmul.f32 %v624, 1.442695
    %v627 = vpow.pop %v626
    %v628 = vmul.f32 %v625, 1.442695
    %v629 = vpow.pop %v628
    %v630 = vsel %vm137, %v627, 0.0
    %631 = vadd.xlane.f32.xlu0 %v630
    %v632 = vpop.xlane.xlu0 %631
    %v633 = vsel %vm137, %v629, 0.0
    %634 = vadd.xlane.f32.xlu0 %v633
    %v635 = vpop.xlane.xlu0 %634
    %v636 = vrcp.pop %v632
    %v637 = vmul.f32 %v632, %v636
    %v638 = vsub.f32 1.0, %v637
    %v639 = vmul.f32 %v636, %v638
    %v640 = vadd.f32 %v636, %v639
    %vm641 = vweird.f32 %v632
    %vm642 = vweird.f32 %v636
    %vm643 = vmor %vm641, %vm642
    %v644 = vsel %vm643, %v636, %v640
    %v645 = vand.u32 2147483647, %v632
    %vm646 = vcmp.eq.f32.partialorder %v645, 8.507059e+37
    %v647 = vand.u32 %v632, 2147483648
    %v648 = vor.u32 1.1754944e-38, %v647
    %v649 = vsel %vm646, %v648, %v644
    %v650 = vmul.f32 1.0, %v649
    %v651 = vrcp.pop %v635
    %v652 = vmul.f32 %v635, %v651
    %v653 = vsub.f32 1.0, %v652
    %v654 = vmul.f32 %v651, %v653
    %v655 = vadd.f32 %v651, %v654
    %vm656 = vweird.f32 %v635
    %vm657 = vweird.f32 %v651
    %vm658 = vmor %vm656, %vm657
    %v659 = vsel %vm658, %v651, %v655
    %v660 = vand.u32 2147483647, %v635
    %vm661 = vcmp.eq.f32.partialorder %v660, 8.507059e+37
    %v662 = vand.u32 %v635, 2147483648
    %v663 = vor.u32 1.1754944e-38, %v662
    %v664 = vsel %vm661, %v663, %v659
    %v665 = vmul.f32 1.0, %v664
    %v666 = vmul.f32 %v627, %v650
    %v667 = vmul.f32 %v629, %v665
    %v668 = vpack.c.bf16 %v666, %v666
    %v669 = vpack.c.bf16 %v667, %v667
    %670 = vrot.lane.b32.xlu0 %v134, 40
    %v671 = vpop.permute.xlu0 %670
    %v673 = vsel %vm137, %v668, 0
    %v676 = vsel %vm242, %v671, 0
    %678 = vmatpush.bf16.msra.mxu0 0
    %679 = vmatpush.bf16.msra.mxu0 0
    %680 = vmatpush.bf16.msra.mxu0 0
    %681 = vmatpush.bf16.msra.mxu0 0
    %682 = vmatpush.bf16.msra.mxu0 0
    %683 = vmatpush.bf16.msra.mxu0 0
    %684 = vmatpush.bf16.msra.mxu0 0
    %685 = vmatpush.bf16.msra.mxu0 %v676
    %686 = vmatmul.bf16.gmra.mxu0 %v673
    %v687 = vpop.f32.mrf.mxu0
    %v688 = vadd.f32 0.0, %v687
    %v689 = vpop.f32.mrf.mxu0
    %690 = vdwg.mxu0
    %691 = vrot.lane.b32.xlu0 %v159, 40
    %v692 = vpop.permute.xlu0 %691
    %v694 = vsel %vm137, %v669, 0
    %v697 = vsel %vm242, %v692, 0
    %699 = vmatpush.bf16.msra.mxu0 0
    %700 = vmatpush.bf16.msra.mxu0 0
    %701 = vmatpush.bf16.msra.mxu0 0
    %702 = vmatpush.bf16.msra.mxu0 0
    %703 = vmatpush.bf16.msra.mxu0 0
    %704 = vmatpush.bf16.msra.mxu0 0
    %705 = vmatpush.bf16.msra.mxu0 0
    %706 = vmatpush.bf16.msra.mxu0 %v697
    %707 = vmatmul.bf16.gmra.mxu0 %v694
    %v708 = vpop.f32.mrf.mxu0
    %v709 = vadd.f32 0.0, %v708
    %v710 = vpop.f32.mrf.mxu0
    %711 = vdwg.mxu0
    %714 = vrot.lane.b32.xlu0 %v400, 8
    %v715 = vpop.permute.xlu0 %714
    %716 = vrot.lane.b32.xlu0 %v421, 8
    %v717 = vpop.permute.xlu0 %716
    %722 = vrot.lane.b32.xlu0 %v544, 16
    %v723 = vpop.permute.xlu0 %722
    %724 = vrot.lane.b32.xlu0 %v565, 16
    %v725 = vpop.permute.xlu0 %724
    %730 = vrot.lane.b32.xlu0 %v688, 24
    %v731 = vpop.permute.xlu0 %730
    %732 = vrot.lane.b32.xlu0 %v709, 24
    %v733 = vpop.permute.xlu0 %732
    %v736 = vsel %vm137, %v256, %v715
    %v737 = vsel %vm137, %v277, %v717
    %vm738 = vcmask 130048
    %v739 = vsel %vm738, %v736, %v723
    %v740 = vsel %vm738, %v737, %v725
    %vm741 = vcmask 195584
    %v742 = vsel %vm741, %v739, %v731
    %v743 = vsel %vm741, %v740, %v733
    %v744 = vld [vmem:[%s4 + $0x20] sm:$0xf]
    %v745 = vld [vmem:[%s4 + $0x24] sm:$0xf]
    %v746 = vld [vmem:[%s4 + $0x28] sm:$0xf]
    %v747 = vld [vmem:[%s4 + $0x2c] sm:$0xf]
    %v748 = vpack.c.bf16 %v743, %v742
    %v749 = vld [vmem:[#allocation7 + $0x2] sm:$0x1]
    %v750 = vperm.slane %v749, 0
    %v755 = vunpack.c.l.b16 %v744
    %v756 = vunpack.c.l.b16 %v745
    %v757 = vunpack.c.l.b16 %v746
    %v758 = vunpack.c.l.b16 %v747
    %v759 = vpack.c.b16 %v756, %v755
    %v760 = vpack.c.b16 %v758, %v757
    %v764 = vsel %vm112, %v748, 0
    %766 = vmatpush.bf16.msra.mxu0 0
    %767 = vmatpush.bf16.msra.mxu0 0
    %768 = vmatpush.bf16.msra.mxu0 0
    %769 = vmatpush.bf16.msra.mxu0 0
    %770 = vmatpush.bf16.msra.mxu0 0
    %771 = vmatpush.bf16.msra.mxu0 0
    %772 = vmatpush.bf16.msra.mxu0 %v760
    %773 = vmatpush.bf16.msra.mxu0 %v759
    %774 = vmatmul.bf16.gmra.mxu0 %v764
    %v775 = vpop.f32.mrf.mxu0
    %v776 = vadd.f32 %v750, %v775
    %v777 = vpop.f32.mrf.mxu0
    %v778 = vadd.f32 %v750, %v777
    %779 = vdwg.mxu0
    %v780 = vadd.f32 %v75, %v776
    %v781 = vadd.f32 %v76, %v778
    %v782 = vsel %vm112, %v780, 0.0
    %783 = vadd.xlane.f32.xlu0 %v782
    %v784 = vpop.xlane.xlu0 %783
    %v785 = vsel %vm112, %v781, 0.0
    %786 = vadd.xlane.f32.xlu0 %v785
    %v787 = vpop.xlane.xlu0 %786
    %v788 = vrcp.pop 32.0
    %v789 = vmul.f32 32.0, %v788
    %v790 = vsub.f32 1.0, %v789
    %v791 = vmul.f32 %v788, %v790
    %v792 = vadd.f32 %v788, %v791
    %vm793 = vweird.f32 %v788
    %v794 = vsel %vm793, %v788, %v792
    %v795 = vmul.f32 %v784, %v794
    %v796 = vmul.f32 %v787, %v794
    %v797 = vsub.f32 %v780, %v795
    %v798 = vsub.f32 %v781, %v796
    %v799 = vmul.f32 %v797, %v797
    %v800 = vmul.f32 %v798, %v798
    %v801 = vsel %vm112, %v799, 0.0
    %802 = vadd.xlane.f32.xlu0 %v801
    %v803 = vpop.xlane.xlu0 %802
    %v804 = vsel %vm112, %v800, 0.0
    %805 = vadd.xlane.f32.xlu0 %v804
    %v806 = vpop.xlane.xlu0 %805
    %v807 = vmul.f32 %v803, %v794
    %v808 = vmul.f32 %v806, %v794
    %v809 = vadd.f32 %v807, 1e-05
    %v810 = vadd.f32 %v808, 1e-05
    %v811 = vrsqrt.pop %v809
    %v812 = vmul.f32 %v811, %v809
    %v813 = vmul.f32 %v812, %v811
    %v814 = vmul.f32 0.5, %v813
    %v815 = vsub.f32 1.5, %v814
    %v816 = vmul.f32 %v811, %v815
    %vm817 = vweird.f32 %v809
    %vm818 = vweird.f32 %v811
    %vm819 = vmor %vm817, %vm818
    %v820 = vsel %vm819, %v811, %v816
    %v821 = vrsqrt.pop %v810
    %v822 = vmul.f32 %v821, %v810
    %v823 = vmul.f32 %v822, %v821
    %v824 = vmul.f32 0.5, %v823
    %v825 = vsub.f32 1.5, %v824
    %v826 = vmul.f32 %v821, %v825
    %vm827 = vweird.f32 %v810
    %vm828 = vweird.f32 %v821
    %vm829 = vmor %vm827, %vm828
    %v830 = vsel %vm829, %v821, %v826
    %v831 = vmul.f32 %v797, %v820
    %v832 = vmul.f32 %v798, %v830
    %v833 = vld [vmem:[#allocation7 + $0x6] sm:$0x1]
    %v834 = vperm.slane %v833, 0
    %v835 = vmul.f32 %v831, %v834
    %v836 = vmul.f32 %v832, %v834
    %v837 = vld [vmem:[#allocation7 + $0x9] sm:$0x1]
    %v838 = vperm.slane %v837, 0
    %v839 = vadd.f32 %v835, %v838
    %v840 = vadd.f32 %v836, %v838
    %v841 = vld [vmem:[%s4 + $0x10] sm:$0xf]
    %v842 = vld [vmem:[%s4 + $0x14] sm:$0xf]
    %v843 = vld [vmem:[%s4 + $0x18] sm:$0xf]
    %v844 = vld [vmem:[%s4 + $0x1c] sm:$0xf]
    %v845 = vpack.c.bf16 %v840, %v839
    %v846 = vld [vmem:[#allocation7 + $0x1] sm:$0x1]
    %v847 = vperm.slane %v846, 0
    %v852 = vunpack.c.l.b16 %v841
    %v853 = vunpack.c.l.b16 %v842
    %v854 = vunpack.c.l.b16 %v843
    %v855 = vunpack.c.l.b16 %v844
    %v856 = vpack.c.b16 %v853, %v852
    %v857 = vpack.c.b16 %v855, %v854
    %v861 = vsel %vm112, %v845, 0
    %863 = vmatpush.bf16.msra.mxu0 0
    %864 = vmatpush.bf16.msra.mxu0 0
    %865 = vmatpush.bf16.msra.mxu0 0
    %866 = vmatpush.bf16.msra.mxu0 0
    %867 = vmatpush.bf16.msra.mxu0 0
    %868 = vmatpush.bf16.msra.mxu0 0
    %869 = vmatpush.bf16.msra.mxu0 %v857
    %870 = vmatpush.bf16.msra.mxu0 %v856
    %871 = vmatmul.bf16.gmra.mxu0 %v861
    %v872 = vpop.f32.mrf.mxu0
    %v873 = vadd.f32 %v847, %v872
    %v874 = vpop.f32.mrf.mxu0
    %v875 = vadd.f32 %v847, %v874
    %876 = vdwg.mxu0
    %v877 = vpack.c.bf16 %v78, %v77
    %v878 = vpack.c.bf16 %v80, %v79
    %879 = vrot.lane.b32.xlu0 %v856, 96
    %v880 = vpop.permute.xlu0 %879
    %881 = vrot.lane.b32.xlu0 %v857, 96
    %v882 = vpop.permute.xlu0 %881
    %886 = vrot.lane.b32.xlu0 %v847, 96
    %v887 = vpop.permute.xlu0 %886
    %v890 = vsel %vm112, %v877, 0
    %v893 = vsel %vm112, %v878, 0
    %895 = vmatpush.bf16.msra.mxu0 0
    %896 = vmatpush.bf16.msra.mxu0 0
    %897 = vmatpush.bf16.msra.mxu0 0
    %898 = vmatpush.bf16.msra.mxu0 0
    %899 = vmatpush.bf16.msra.mxu0 0
    %900 = vmatpush.bf16.msra.mxu0 0
    %901 = vmatpush.bf16.msra.mxu0 %v882
    %902 = vmatpush.bf16.msra.mxu0 %v880
    %903 = vmatmul.bf16.gmra.mxu0 %v890
    %v904 = vpop.f32.mrf.mxu0
    %v905 = vadd.f32 %v887, %v904
    %v906 = vpop.f32.mrf.mxu0
    %v907 = vadd.f32 %v887, %v906
    %908 = vmatmul.bf16.gmra.mxu0 %v893
    %v909 = vpop.f32.mrf.mxu0
    %v910 = vadd.f32 %v887, %v909
    %v911 = vpop.f32.mrf.mxu0
    %v912 = vadd.f32 %v887, %v911
    %913 = vdwg.mxu0
    %v914 = vpack.c.bf16 %v873, %v873
    %v915 = vpack.c.bf16 %v875, %v875
    %v916 = vpack.c.bf16 %v905, %v905
    %v917 = vpack.c.bf16 %v907, %v907
    %v918 = vpack.c.bf16 %v910, %v910
    %v919 = vpack.c.bf16 %v912, %v912
    %v922 = vunpack.c.l.b16 %v916
    %v923 = vunpack.c.l.b16 %v917
    %v924 = vpack.c.b16 %v923, %v922
    %v926 = vsel %vm137, %v914, 0
    %v929 = vsel %vm137, %v924, 0
    %931 = vmatpush.bf16.xpose.msra.mxu0 0
    %932 = vmatpush.bf16.xpose.msra.mxu0 0
    %933 = vmatpush.bf16.xpose.msra.mxu0 0
    %934 = vmatpush.bf16.xpose.msra.mxu0 0
    %935 = vmatpush.bf16.xpose.msra.mxu0 0
    %936 = vmatpush.bf16.xpose.msra.mxu0 0
    %937 = vmatpush.bf16.xpose.msra.mxu0 0
    %938 = vmatpush.bf16.xpose.msra.mxu0 %v929
    %939 = vmatmul.bf16.gmra.mxu0 %v926
    %v940 = vpop.f32.mrf.mxu0
    %v941 = vadd.f32 0.0, %v940
    %v942 = vpop.f32.mrf.mxu0
    %943 = vdwg.mxu0
    %v946 = vunpack.c.l.b16 %v918
    %v947 = vunpack.c.l.b16 %v919
    %v948 = vpack.c.b16 %v947, %v946
    %v950 = vsel %vm137, %v915, 0
    %v953 = vsel %vm137, %v948, 0
    %955 = vmatpush.bf16.xpose.msra.mxu0 0
    %956 = vmatpush.bf16.xpose.msra.mxu0 0
    %957 = vmatpush.bf16.xpose.msra.mxu0 0
    %958 = vmatpush.bf16.xpose.msra.mxu0 0
    %959 = vmatpush.bf16.xpose.msra.mxu0 0
    %960 = vmatpush.bf16.xpose.msra.mxu0 0
    %961 = vmatpush.bf16.xpose.msra.mxu0 0
    %962 = vmatpush.bf16.xpose.msra.mxu0 %v953
    %963 = vmatmul.bf16.gmra.mxu0 %v950
    %v964 = vpop.f32.mrf.mxu0
    %v965 = vadd.f32 0.0, %v964
    %v966 = vpop.f32.mrf.mxu0
    %967 = vdwg.mxu0
    %v968 = vmul.f32 %v941, 0.35355338
    %v969 = vmul.f32 %v965, 0.35355338
    %v972 = vperm.slane %v91, 0
    %v973 = vperm.slane %v92, 0
    %v976 = vadd.f32 %v968, %v972
    %v977 = vadd.f32 %v969, %v973
    %v978 = vsel %vm738, %v976, -inf
    %979 = vmax.xlane.f32.xlu0 %v978
    %v980 = vpop.xlane.xlu0 %979
    %v981 = vsel %vm738, %v977, -inf
    %982 = vmax.xlane.f32.xlu0 %v981
    %v983 = vpop.xlane.xlu0 %982
    %v984 = vsub.f32 %v976, %v980
    %v985 = vsub.f32 %v977, %v983
    %v986 = vmul.f32 %v984, 1.442695
    %v987 = vpow.pop %v986
    %v988 = vmul.f32 %v985, 1.442695
    %v989 = vpow.pop %v988
    %v990 = vsel %vm738, %v987, 0.0
    %991 = vadd.xlane.f32.xlu0 %v990
    %v992 = vpop.xlane.xlu0 %991
    %v993 = vsel %vm738, %v989, 0.0
    %994 = vadd.xlane.f32.xlu0 %v993
    %v995 = vpop.xlane.xlu0 %994
    %v996 = vrcp.pop %v992
    %v997 = vmul.f32 %v992, %v996
    %v998 = vsub.f32 1.0, %v997
    %v999 = vmul.f32 %v996, %v998
    %v1000 = vadd.f32 %v996, %v999
    %vm1001 = vweird.f32 %v992
    %vm1002 = vweird.f32 %v996
    %vm1003 = vmor %vm1001, %vm1002
    %v1004 = vsel %vm1003, %v996, %v1000
    %v1005 = vand.u32 2147483647, %v992
    %vm1006 = vcmp.eq.f32.partialorder %v1005, 8.507059e+37
    %v1007 = vand.u32 %v992, 2147483648
    %v1008 = vor.u32 1.1754944e-38, %v1007
    %v1009 = vsel %vm1006, %v1008, %v1004
    %v1010 = vmul.f32 1.0, %v1009
    %v1011 = vrcp.pop %v995
    %v1012 = vmul.f32 %v995, %v1011
    %v1013 = vsub.f32 1.0, %v1012
    %v1014 = vmul.f32 %v1011, %v1013
    %v1015 = vadd.f32 %v1011, %v1014
    %vm1016 = vweird.f32 %v995
    %vm1017 = vweird.f32 %v1011
    %vm1018 = vmor %vm1016, %vm1017
    %v1019 = vsel %vm1018, %v1011, %v1015
    %v1020 = vand.u32 2147483647, %v995
    %vm1021 = vcmp.eq.f32.partialorder %v1020, 8.507059e+37
    %v1022 = vand.u32 %v995, 2147483648
    %v1023 = vor.u32 1.1754944e-38, %v1022
    %v1024 = vsel %vm1021, %v1023, %v1019
    %v1025 = vmul.f32 1.0, %v1024
    %v1026 = vmul.f32 %v987, %v1010
    %v1027 = vmul.f32 %v989, %v1025
    %v1028 = vpack.c.bf16 %v1026, %v1026
    %v1029 = vpack.c.bf16 %v1027, %v1027
    %1030 = vrot.lane.b32.xlu0 %v924, 96
    %v1031 = vpop.permute.xlu0 %1030
    %v1034 = vsel %vm738, %v1028, 0
    %1036 = vmatpush.bf16.msra.mxu0 0
    %1037 = vmatpush.bf16.msra.mxu0 0
    %1038 = vmatpush.bf16.msra.mxu0 0
    %1039 = vmatpush.bf16.msra.mxu0 0
    %1040 = vmatpush.bf16.msra.mxu0 0
    %1041 = vmatpush.bf16.msra.mxu0 0
    %1042 = vmatpush.bf16.msra.mxu0 0
    %1043 = vmatpush.bf16.msra.mxu0 %v1031
    %1044 = vmatmul.bf16.gmra.mxu0 %v1034
    %v1045 = vpop.f32.mrf.mxu0
    %v1046 = vadd.f32 0.0, %v1045
    %v1047 = vpop.f32.mrf.mxu0
    %1048 = vdwg.mxu0
    %1049 = vrot.lane.b32.xlu0 %v948, 96
    %v1050 = vpop.permute.xlu0 %1049
    %v1053 = vsel %vm738, %v1029, 0
    %1055 = vmatpush.bf16.msra.mxu0 0
    %1056 = vmatpush.bf16.msra.mxu0 0
    %1057 = vmatpush.bf16.msra.mxu0 0
    %1058 = vmatpush.bf16.msra.mxu0 0
    %1059 = vmatpush.bf16.msra.mxu0 0
    %1060 = vmatpush.bf16.msra.mxu0 0
    %1061 = vmatpush.bf16.msra.mxu0 0
    %1062 = vmatpush.bf16.msra.mxu0 %v1050
    %1063 = vmatmul.bf16.gmra.mxu0 %v1053
    %v1064 = vpop.f32.mrf.mxu0
    %v1065 = vadd.f32 0.0, %v1064
    %v1066 = vpop.f32.mrf.mxu0
    %1067 = vdwg.mxu0
    %v1069 = vunpack.c.l.b16 %v914
    %v1070 = vpack.c.b16 %v1069, %v1069
    %1071 = vrot.lane.b32.xlu0 %v1070, 120
    %v1072 = vpop.permute.xlu0 %1071
    %1073 = vrot.lane.b32.xlu0 %v924, 120
    %v1074 = vpop.permute.xlu0 %1073
    %v1076 = vsel %vm137, %v1072, 0
    %v1079 = vsel %vm137, %v1074, 0
    %1081 = vmatpush.bf16.xpose.msra.mxu0 0
    %1082 = vmatpush.bf16.xpose.msra.mxu0 0
    %1083 = vmatpush.bf16.xpose.msra.mxu0 0
    %1084 = vmatpush.bf16.xpose.msra.mxu0 0
    %1085 = vmatpush.bf16.xpose.msra.mxu0 0
    %1086 = vmatpush.bf16.xpose.msra.mxu0 0
    %1087 = vmatpush.bf16.xpose.msra.mxu0 0
    %1088 = vmatpush.bf16.xpose.msra.mxu0 %v1079
    %1089 = vmatmul.bf16.gmra.mxu0 %v1076
    %v1090 = vpop.f32.mrf.mxu0
    %v1091 = vadd.f32 0.0, %v1090
    %v1092 = vpop.f32.mrf.mxu0
    %1093 = vdwg.mxu0
    %v1095 = vunpack.c.l.b16 %v915
    %v1096 = vpack.c.b16 %v1095, %v1095
    %1097 = vrot.lane.b32.xlu0 %v1096, 120
    %v1098 = vpop.permute.xlu0 %1097
    %1099 = vrot.lane.b32.xlu0 %v948, 120
    %v1100 = vpop.permute.xlu0 %1099
    %v1102 = vsel %vm137, %v1098, 0
    %v1105 = vsel %vm137, %v1100, 0
    %1107 = vmatpush.bf16.xpose.msra.mxu0 0
    %1108 = vmatpush.bf16.xpose.msra.mxu0 0
    %1109 = vmatpush.bf16.xpose.msra.mxu0 0
    %1110 = vmatpush.bf16.xpose.msra.mxu0 0
    %1111 = vmatpush.bf16.xpose.msra.mxu0 0
    %1112 = vmatpush.bf16.xpose.msra.mxu0 0
    %1113 = vmatpush.bf16.xpose.msra.mxu0 0
    %1114 = vmatpush.bf16.xpose.msra.mxu0 %v1105
    %1115 = vmatmul.bf16.gmra.mxu0 %v1102
    %v1116 = vpop.f32.mrf.mxu0
    %v1117 = vadd.f32 0.0, %v1116
    %v1118 = vpop.f32.mrf.mxu0
    %1119 = vdwg.mxu0
    %v1120 = vmul.f32 %v1091, 0.35355338
    %v1121 = vmul.f32 %v1117, 0.35355338
    %v1122 = vadd.f32 %v1120, %v972
    %v1123 = vadd.f32 %v1121, %v973
    %v1124 = vsel %vm738, %v1122, -inf
    %1125 = vmax.xlane.f32.xlu0 %v1124
    %v1126 = vpop.xlane.xlu0 %1125
    %v1127 = vsel %vm738, %v1123, -inf
    %1128 = vmax.xlane.f32.xlu0 %v1127
    %v1129 = vpop.xlane.xlu0 %1128
    %v1130 = vsub.f32 %v1122, %v1126
    %v1131 = vsub.f32 %v1123, %v1129
    %v1132 = vmul.f32 %v1130, 1.442695
    %v1133 = vpow.pop %v1132
    %v1134 = vmul.f32 %v1131, 1.442695
    %v1135 = vpow.pop %v1134
    %v1136 = vsel %vm738, %v1133, 0.0
    %1137 = vadd.xlane.f32.xlu0 %v1136
    %v1138 = vpop.xlane.xlu0 %1137
    %v1139 = vsel %vm738, %v1135, 0.0
    %1140 = vadd.xlane.f32.xlu0 %v1139
    %v1141 = vpop.xlane.xlu0 %1140
    %v1142 = vrcp.pop %v1138
    %v1143 = vmul.f32 %v1138, %v1142
    %v1144 = vsub.f32 1.0, %v1143
    %v1145 = vmul.f32 %v1142, %v1144
    %v1146 = vadd.f32 %v1142, %v1145
    %vm1147 = vweird.f32 %v1138
    %vm1148 = vweird.f32 %v1142
    %vm1149 = vmor %vm1147, %vm1148
    %v1150 = vsel %vm1149, %v1142, %v1146
    %v1151 = vand.u32 2147483647, %v1138
    %vm1152 = vcmp.eq.f32.partialorder %v1151, 8.507059e+37
    %v1153 = vand.u32 %v1138, 2147483648
    %v1154 = vor.u32 1.1754944e-38, %v1153
    %v1155 = vsel %vm1152, %v1154, %v1150
    %v1156 = vmul.f32 1.0, %v1155
    %v1157 = vrcp.pop %v1141
    %v1158 = vmul.f32 %v1141, %v1157
    %v1159 = vsub.f32 1.0, %v1158
    %v1160 = vmul.f32 %v1157, %v1159
    %v1161 = vadd.f32 %v1157, %v1160
    %vm1162 = vweird.f32 %v1141
    %vm1163 = vweird.f32 %v1157
    %vm1164 = vmor %vm1162, %vm1163
    %v1165 = vsel %vm1164, %v1157, %v1161
    %v1166 = vand.u32 2147483647, %v1141
    %vm1167 = vcmp.eq.f32.partialorder %v1166, 8.507059e+37
    %v1168 = vand.u32 %v1141, 2147483648
    %v1169 = vor.u32 1.1754944e-38, %v1168
    %v1170 = vsel %vm1167, %v1169, %v1165
    %v1171 = vmul.f32 1.0, %v1170
    %v1172 = vmul.f32 %v1133, %v1156
    %v1173 = vmul.f32 %v1135, %v1171
    %v1174 = vpack.c.bf16 %v1172, %v1172
    %v1175 = vpack.c.bf16 %v1173, %v1173
    %1176 = vrot.lane.b32.xlu0 %v924, 88
    %v1177 = vpop.permute.xlu0 %1176
    %v1180 = vsel %vm738, %v1174, 0
    %1182 = vmatpush.bf16.msra.mxu0 0
    %1183 = vmatpush.bf16.msra.mxu0 0
    %1184 = vmatpush.bf16.msra.mxu0 0
    %1185 = vmatpush.bf16.msra.mxu0 0
    %1186 = vmatpush.bf16.msra.mxu0 0
    %1187 = vmatpush.bf16.msra.mxu0 0
    %1188 = vmatpush.bf16.msra.mxu0 0
    %1189 = vmatpush.bf16.msra.mxu0 %v1177
    %1190 = vmatmul.bf16.gmra.mxu0 %v1180
    %v1191 = vpop.f32.mrf.mxu0
    %v1192 = vadd.f32 0.0, %v1191
    %v1193 = vpop.f32.mrf.mxu0
    %1194 = vdwg.mxu0
    %1195 = vrot.lane.b32.xlu0 %v948, 88
    %v1196 = vpop.permute.xlu0 %1195
    %v1199 = vsel %vm738, %v1175, 0
    %1201 = vmatpush.bf16.msra.mxu0 0
    %1202 = vmatpush.bf16.msra.mxu0 0
    %1203 = vmatpush.bf16.msra.mxu0 0
    %1204 = vmatpush.bf16.msra.mxu0 0
    %1205 = vmatpush.bf16.msra.mxu0 0
    %1206 = vmatpush.bf16.msra.mxu0 0
    %1207 = vmatpush.bf16.msra.mxu0 0
    %1208 = vmatpush.bf16.msra.mxu0 %v1196
    %1209 = vmatmul.bf16.gmra.mxu0 %v1199
    %v1210 = vpop.f32.mrf.mxu0
    %v1211 = vadd.f32 0.0, %v1210
    %v1212 = vpop.f32.mrf.mxu0
    %1213 = vdwg.mxu0
    %1214 = vrot.lane.b32.xlu0 %v1070, 112
    %v1215 = vpop.permute.xlu0 %1214
    %1216 = vrot.lane.b32.xlu0 %v924, 112
    %v1217 = vpop.permute.xlu0 %1216
    %v1219 = vsel %vm137, %v1215, 0
    %v1222 = vsel %vm137, %v1217, 0
    %1224 = vmatpush.bf16.xpose.msra.mxu0 0
    %1225 = vmatpush.bf16.xpose.msra.mxu0 0
    %1226 = vmatpush.bf16.xpose.msra.mxu0 0
    %1227 = vmatpush.bf16.xpose.msra.mxu0 0
    %1228 = vmatpush.bf16.xpose.msra.mxu0 0
    %1229 = vmatpush.bf16.xpose.msra.mxu0 0
    %1230 = vmatpush.bf16.xpose.msra.mxu0 0
    %1231 = vmatpush.bf16.xpose.msra.mxu0 %v1222
    %1232 = vmatmul.bf16.gmra.mxu0 %v1219
    %v1233 = vpop.f32.mrf.mxu0
    %v1234 = vadd.f32 0.0, %v1233
    %v1235 = vpop.f32.mrf.mxu0
    %1236 = vdwg.mxu0
    %1237 = vrot.lane.b32.xlu0 %v1096, 112
    %v1238 = vpop.permute.xlu0 %1237
    %1239 = vrot.lane.b32.xlu0 %v948, 112
    %v1240 = vpop.permute.xlu0 %1239
    %v1242 = vsel %vm137, %v1238, 0
    %v1245 = vsel %vm137, %v1240, 0
    %1247 = vmatpush.bf16.xpose.msra.mxu0 0
    %1248 = vmatpush.bf16.xpose.msra.mxu0 0
    %1249 = vmatpush.bf16.xpose.msra.mxu0 0
    %1250 = vmatpush.bf16.xpose.msra.mxu0 0
    %1251 = vmatpush.bf16.xpose.msra.mxu0 0
    %1252 = vmatpush.bf16.xpose.msra.mxu0 0
    %1253 = vmatpush.bf16.xpose.msra.mxu0 0
    %1254 = vmatpush.bf16.xpose.msra.mxu0 %v1245
    %1255 = vmatmul.bf16.gmra.mxu0 %v1242
    %v1256 = vpop.f32.mrf.mxu0
    %v1257 = vadd.f32 0.0, %v1256
    %v1258 = vpop.f32.mrf.mxu0
    %1259 = vdwg.mxu0
    %v1260 = vmul.f32 %v1234, 0.35355338
    %v1261 = vmul.f32 %v1257, 0.35355338
    %v1262 = vadd.f32 %v1260, %v972
    %v1263 = vadd.f32 %v1261, %v973
    %v1264 = vsel %vm738, %v1262, -inf
    %1265 = vmax.xlane.f32.xlu0 %v1264
    %v1266 = vpop.xlane.xlu0 %1265
    %v1267 = vsel %vm738, %v1263, -inf
    %1268 = vmax.xlane.f32.xlu0 %v1267
    %v1269 = vpop.xlane.xlu0 %1268
    %v1270 = vsub.f32 %v1262, %v1266
    %v1271 = vsub.f32 %v1263, %v1269
    %v1272 = vmul.f32 %v1270, 1.442695
    %v1273 = vpow.pop %v1272
    %v1274 = vmul.f32 %v1271, 1.442695
    %v1275 = vpow.pop %v1274
    %v1276 = vsel %vm738, %v1273, 0.0
    %1277 = vadd.xlane.f32.xlu0 %v1276
    %v1278 = vpop.xlane.xlu0 %1277
    %v1279 = vsel %vm738, %v1275, 0.0
    %1280 = vadd.xlane.f32.xlu0 %v1279
    %v1281 = vpop.xlane.xlu0 %1280
    %v1282 = vrcp.pop %v1278
    %v1283 = vmul.f32 %v1278, %v1282
    %v1284 = vsub.f32 1.0, %v1283
    %v1285 = vmul.f32 %v1282, %v1284
    %v1286 = vadd.f32 %v1282, %v1285
    %vm1287 = vweird.f32 %v1278
    %vm1288 = vweird.f32 %v1282
    %vm1289 = vmor %vm1287, %vm1288
    %v1290 = vsel %vm1289, %v1282, %v1286
    %v1291 = vand.u32 2147483647, %v1278
    %vm1292 = vcmp.eq.f32.partialorder %v1291, 8.507059e+37
    %v1293 = vand.u32 %v1278, 2147483648
    %v1294 = vor.u32 1.1754944e-38, %v1293
    %v1295 = vsel %vm1292, %v1294, %v1290
    %v1296 = vmul.f32 1.0, %v1295
    %v1297 = vrcp.pop %v1281
    %v1298 = vmul.f32 %v1281, %v1297
    %v1299 = vsub.f32 1.0, %v1298
    %v1300 = vmul.f32 %v1297, %v1299
    %v1301 = vadd.f32 %v1297, %v1300
    %vm1302 = vweird.f32 %v1281
    %vm1303 = vweird.f32 %v1297
    %vm1304 = vmor %vm1302, %vm1303
    %v1305 = vsel %vm1304, %v1297, %v1301
    %v1306 = vand.u32 2147483647, %v1281
    %vm1307 = vcmp.eq.f32.partialorder %v1306, 8.507059e+37
    %v1308 = vand.u32 %v1281, 2147483648
    %v1309 = vor.u32 1.1754944e-38, %v1308
    %v1310 = vsel %vm1307, %v1309, %v1305
    %v1311 = vmul.f32 1.0, %v1310
    %v1312 = vmul.f32 %v1273, %v1296
    %v1313 = vmul.f32 %v1275, %v1311
    %v1314 = vpack.c.bf16 %v1312, %v1312
    %v1315 = vpack.c.bf16 %v1313, %v1313
    %1316 = vrot.lane.b32.xlu0 %v924, 80
    %v1317 = vpop.permute.xlu0 %1316
    %v1320 = vsel %vm738, %v1314, 0
    %1322 = vmatpush.bf16.msra.mxu0 0
    %1323 = vmatpush.bf16.msra.mxu0 0
    %1324 = vmatpush.bf16.msra.mxu0 0
    %1325 = vmatpush.bf16.msra.mxu0 0
    %1326 = vmatpush.bf16.msra.mxu0 0
    %1327 = vmatpush.bf16.msra.mxu0 0
    %1328 = vmatpush.bf16.msra.mxu0 0
    %1329 = vmatpush.bf16.msra.mxu0 %v1317
    %1330 = vmatmul.bf16.gmra.mxu0 %v1320
    %v1331 = vpop.f32.mrf.mxu0
    %v1332 = vadd.f32 0.0, %v1331
    %v1333 = vpop.f32.mrf.mxu0
    %1334 = vdwg.mxu0
    %1335 = vrot.lane.b32.xlu0 %v948, 80
    %v1336 = vpop.permute.xlu0 %1335
    %v1339 = vsel %vm738, %v1315, 0
    %1341 = vmatpush.bf16.msra.mxu0 0
    %1342 = vmatpush.bf16.msra.mxu0 0
    %1343 = vmatpush.bf16.msra.mxu0 0
    %1344 = vmatpush.bf16.msra.mxu0 0
    %1345 = vmatpush.bf16.msra.mxu0 0
    %1346 = vmatpush.bf16.msra.mxu0 0
    %1347 = vmatpush.bf16.msra.mxu0 0
    %1348 = vmatpush.bf16.msra.mxu0 %v1336
    %1349 = vmatmul.bf16.gmra.mxu0 %v1339
    %v1350 = vpop.f32.mrf.mxu0
    %v1351 = vadd.f32 0.0, %v1350
    %v1352 = vpop.f32.mrf.mxu0
    %1353 = vdwg.mxu0
    %1354 = vrot.lane.b32.xlu0 %v1070, 104
    %v1355 = vpop.permute.xlu0 %1354
    %1356 = vrot.lane.b32.xlu0 %v924, 104
    %v1357 = vpop.permute.xlu0 %1356
    %v1359 = vsel %vm137, %v1355, 0
    %v1362 = vsel %vm137, %v1357, 0
    %1364 = vmatpush.bf16.xpose.msra.mxu0 0
    %1365 = vmatpush.bf16.xpose.msra.mxu0 0
    %1366 = vmatpush.bf16.xpose.msra.mxu0 0
    %1367 = vmatpush.bf16.xpose.msra.mxu0 0
    %1368 = vmatpush.bf16.xpose.msra.mxu0 0
    %1369 = vmatpush.bf16.xpose.msra.mxu0 0
    %1370 = vmatpush.bf16.xpose.msra.mxu0 0
    %1371 = vmatpush.bf16.xpose.msra.mxu0 %v1362
    %1372 = vmatmul.bf16.gmra.mxu0 %v1359
    %v1373 = vpop.f32.mrf.mxu0
    %v1374 = vadd.f32 0.0, %v1373
    %v1375 = vpop.f32.mrf.mxu0
    %1376 = vdwg.mxu0
    %1377 = vrot.lane.b32.xlu0 %v1096, 104
    %v1378 = vpop.permute.xlu0 %1377
    %1379 = vrot.lane.b32.xlu0 %v948, 104
    %v1380 = vpop.permute.xlu0 %1379
    %v1382 = vsel %vm137, %v1378, 0
    %v1385 = vsel %vm137, %v1380, 0
    %1387 = vmatpush.bf16.xpose.msra.mxu0 0
    %1388 = vmatpush.bf16.xpose.msra.mxu0 0
    %1389 = vmatpush.bf16.xpose.msra.mxu0 0
    %1390 = vmatpush.bf16.xpose.msra.mxu0 0
    %1391 = vmatpush.bf16.xpose.msra.mxu0 0
    %1392 = vmatpush.bf16.xpose.msra.mxu0 0
    %1393 = vmatpush.bf16.xpose.msra.mxu0 0
    %1394 = vmatpush.bf16.xpose.msra.mxu0 %v1385
    %1395 = vmatmul.bf16.gmra.mxu0 %v1382
    %v1396 = vpop.f32.mrf.mxu0
    %v1397 = vadd.f32 0.0, %v1396
    %v1398 = vpop.f32.mrf.mxu0
    %1399 = vdwg.mxu0
    %v1400 = vmul.f32 %v1374, 0.35355338
    %v1401 = vmul.f32 %v1397, 0.35355338
    %v1402 = vadd.f32 %v1400, %v972
    %v1403 = vadd.f32 %v1401, %v973
    %v1404 = vsel %vm738, %v1402, -inf
    %1405 = vmax.xlane.f32.xlu0 %v1404
    %v1406 = vpop.xlane.xlu0 %1405
    %v1407 = vsel %vm738, %v1403, -inf
    %1408 = vmax.xlane.f32.xlu0 %v1407
    %v1409 = vpop.xlane.xlu0 %1408
    %v1410 = vsub.f32 %v1402, %v1406
    %v1411 = vsub.f32 %v1403, %v1409
    %v1412 = vmul.f32 %v1410, 1.442695
    %v1413 = vpow.pop %v1412
    %v1414 = vmul.f32 %v1411, 1.442695
    %v1415 = vpow.pop %v1414
    %v1416 = vsel %vm738, %v1413, 0.0
    %1417 = vadd.xlane.f32.xlu0 %v1416
    %v1418 = vpop.xlane.xlu0 %1417
    %v1419 = vsel %vm738, %v1415, 0.0
    %1420 = vadd.xlane.f32.xlu0 %v1419
    %v1421 = vpop.xlane.xlu0 %1420
    %v1422 = vrcp.pop %v1418
    %v1423 = vmul.f32 %v1418, %v1422
    %v1424 = vsub.f32 1.0, %v1423
    %v1425 = vmul.f32 %v1422, %v1424
    %v1426 = vadd.f32 %v1422, %v1425
    %vm1427 = vweird.f32 %v1418
    %vm1428 = vweird.f32 %v1422
    %vm1429 = vmor %vm1427, %vm1428
    %v1430 = vsel %vm1429, %v1422, %v1426
    %v1431 = vand.u32 2147483647, %v1418
    %vm1432 = vcmp.eq.f32.partialorder %v1431, 8.507059e+37
    %v1433 = vand.u32 %v1418, 2147483648
    %v1434 = vor.u32 1.1754944e-38, %v1433
    %v1435 = vsel %vm1432, %v1434, %v1430
    %v1436 = vmul.f32 1.0, %v1435
    %v1437 = vrcp.pop %v1421
    %v1438 = vmul.f32 %v1421, %v1437
    %v1439 = vsub.f32 1.0, %v1438
    %v1440 = vmul.f32 %v1437, %v1439
    %v1441 = vadd.f32 %v1437, %v1440
    %vm1442 = vweird.f32 %v1421
    %vm1443 = vweird.f32 %v1437
    %vm1444 = vmor %vm1442, %vm1443
    %v1445 = vsel %vm1444, %v1437, %v1441
    %v1446 = vand.u32 2147483647, %v1421
    %vm1447 = vcmp.eq.f32.partialorder %v1446, 8.507059e+37
    %v1448 = vand.u32 %v1421, 2147483648
    %v1449 = vor.u32 1.1754944e-38, %v1448
    %v1450 = vsel %vm1447, %v1449, %v1445
    %v1451 = vmul.f32 1.0, %v1450
    %v1452 = vmul.f32 %v1413, %v1436
    %v1453 = vmul.f32 %v1415, %v1451
    %v1454 = vpack.c.bf16 %v1452, %v1452
    %v1455 = vpack.c.bf16 %v1453, %v1453
    %1456 = vrot.lane.b32.xlu0 %v924, 72
    %v1457 = vpop.permute.xlu0 %1456
    %v1460 = vsel %vm738, %v1454, 0
    %1462 = vmatpush.bf16.msra.mxu0 0
    %1463 = vmatpush.bf16.msra.mxu0 0
    %1464 = vmatpush.bf16.msra.mxu0 0
    %1465 = vmatpush.bf16.msra.mxu0 0
    %1466 = vmatpush.bf16.msra.mxu0 0
    %1467 = vmatpush.bf16.msra.mxu0 0
    %1468 = vmatpush.bf16.msra.mxu0 0
    %1469 = vmatpush.bf16.msra.mxu0 %v1457
    %1470 = vmatmul.bf16.gmra.mxu0 %v1460
    %v1471 = vpop.f32.mrf.mxu0
    %v1472 = vadd.f32 0.0, %v1471
    %v1473 = vpop.f32.mrf.mxu0
    %1474 = vdwg.mxu0
    %1475 = vrot.lane.b32.xlu0 %v948, 72
    %v1476 = vpop.permute.xlu0 %1475
    %v1479 = vsel %vm738, %v1455, 0
    %1481 = vmatpush.bf16.msra.mxu0 0
    %1482 = vmatpush.bf16.msra.mxu0 0
    %1483 = vmatpush.bf16.msra.mxu0 0
    %1484 = vmatpush.bf16.msra.mxu0 0
    %1485 = vmatpush.bf16.msra.mxu0 0
    %1486 = vmatpush.bf16.msra.mxu0 0
    %1487 = vmatpush.bf16.msra.mxu0 0
    %1488 = vmatpush.bf16.msra.mxu0 %v1476
    %1489 = vmatmul.bf16.gmra.mxu0 %v1479
    %v1490 = vpop.f32.mrf.mxu0
    %v1491 = vadd.f32 0.0, %v1490
    %v1492 = vpop.f32.mrf.mxu0
    %1493 = vdwg.mxu0
    %1496 = vrot.lane.b32.xlu0 %v1192, 8
    %v1497 = vpop.permute.xlu0 %1496
    %1498 = vrot.lane.b32.xlu0 %v1211, 8
    %v1499 = vpop.permute.xlu0 %1498
    %1504 = vrot.lane.b32.xlu0 %v1332, 16
    %v1505 = vpop.permute.xlu0 %1504
    %1506 = vrot.lane.b32.xlu0 %v1351, 16
    %v1507 = vpop.permute.xlu0 %1506
    %1512 = vrot.lane.b32.xlu0 %v1472, 24
    %v1513 = vpop.permute.xlu0 %1512
    %1514 = vrot.lane.b32.xlu0 %v1491, 24
    %v1515 = vpop.permute.xlu0 %1514
    %v1518 = vsel %vm137, %v1046, %v1497
    %v1519 = vsel %vm137, %v1065, %v1499
    %v1520 = vsel %vm738, %v1518, %v1505
    %v1521 = vsel %vm738, %v1519, %v1507
    %v1522 = vsel %vm741, %v1520, %v1513
    %v1523 = vsel %vm741, %v1521, %v1515
    %v1524 = vld [vmem:[%s4 + $0x30] sm:$0xf]
    %v1525 = vld [vmem:[%s4 + $0x34] sm:$0xf]
    %v1526 = vld [vmem:[%s4 + $0x38] sm:$0xf]
    %v1527 = vld [vmem:[%s4 + $0x3c] sm:$0xf]
    %v1528 = vpack.c.bf16 %v1523, %v1522
    %v1529 = vld [vmem:[#allocation7 + $0x3] sm:$0x1]
    %v1530 = vperm.slane %v1529, 0
    %v1535 = vunpack.c.l.b16 %v1524
    %v1536 = vunpack.c.l.b16 %v1525
    %v1537 = vunpack.c.l.b16 %v1526
    %v1538 = vunpack.c.l.b16 %v1527
    %v1539 = vpack.c.b16 %v1536, %v1535
    %v1540 = vpack.c.b16 %v1538, %v1537
    %v1544 = vsel %vm112, %v1528, 0
    %1546 = vmatpush.bf16.msra.mxu0 0
    %1547 = vmatpush.bf16.msra.mxu0 0
    %1548 = vmatpush.bf16.msra.mxu0 0
    %1549 = vmatpush.bf16.msra.mxu0 0
    %1550 = vmatpush.bf16.msra.mxu0 0
    %1551 = vmatpush.bf16.msra.mxu0 0
    %1552 = vmatpush.bf16.msra.mxu0 %v1540
    %1553 = vmatpush.bf16.msra.mxu0 %v1539
    %1554 = vmatmul.bf16.gmra.mxu0 %v1544
    %v1555 = vpop.f32.mrf.mxu0
    %v1556 = vadd.f32 %v1530, %v1555
    %v1557 = vpop.f32.mrf.mxu0
    %v1558 = vadd.f32 %v1530, %v1557
    %1559 = vdwg.mxu0
    %v1560 = vadd.f32 %v839, %v1556
    %v1561 = vadd.f32 %v840, %v1558
    %v1562 = vsel %vm112, %v1560, 0.0
    %1563 = vadd.xlane.f32.xlu0 %v1562
    %v1564 = vpop.xlane.xlu0 %1563
    %v1565 = vsel %vm112, %v1561, 0.0
    %1566 = vadd.xlane.f32.xlu0 %v1565
    %v1567 = vpop.xlane.xlu0 %1566
    %v1568 = vmul.f32 %v1564, %v794
    %v1569 = vmul.f32 %v1567, %v794
    %v1570 = vsub.f32 %v1560, %v1568
    %v1571 = vsub.f32 %v1561, %v1569
    %v1572 = vmul.f32 %v1570, %v1570
    %v1573 = vmul.f32 %v1571, %v1571
    %v1574 = vsel %vm112, %v1572, 0.0
    %1575 = vadd.xlane.f32.xlu0 %v1574
    %v1576 = vpop.xlane.xlu0 %1575
    %v1577 = vsel %vm112, %v1573, 0.0
    %1578 = vadd.xlane.f32.xlu0 %v1577
    %v1579 = vpop.xlane.xlu0 %1578
    %v1580 = vmul.f32 %v1576, %v794
    %v1581 = vmul.f32 %v1579, %v794
    %v1582 = vadd.f32 %v1580, 1e-05
    %v1583 = vadd.f32 %v1581, 1e-05
    %v1584 = vrsqrt.pop %v1582
    %v1585 = vmul.f32 %v1584, %v1582
    %v1586 = vmul.f32 %v1585, %v1584
    %v1587 = vmul.f32 0.5, %v1586
    %v1588 = vsub.f32 1.5, %v1587
    %v1589 = vmul.f32 %v1584, %v1588
    %vm1590 = vweird.f32 %v1582
    %vm1591 = vweird.f32 %v1584
    %vm1592 = vmor %vm1590, %vm1591
    %v1593 = vsel %vm1592, %v1584, %v1589
    %v1594 = vrsqrt.pop %v1583
    %v1595 = vmul.f32 %v1594, %v1583
    %v1596 = vmul.f32 %v1595, %v1594
    %v1597 = vmul.f32 0.5, %v1596
    %v1598 = vsub.f32 1.5, %v1597
    %v1599 = vmul.f32 %v1594, %v1598
    %vm1600 = vweird.f32 %v1583
    %vm1601 = vweird.f32 %v1594
    %vm1602 = vmor %vm1600, %vm1601
    %v1603 = vsel %vm1602, %v1594, %v1599
    %v1604 = vmul.f32 %v1570, %v1593
    %v1605 = vmul.f32 %v1571, %v1603
    %v1606 = vld [vmem:[#allocation7 + $0x7] sm:$0x1]
    %v1607 = vperm.slane %v1606, 0
    %v1608 = vmul.f32 %v1604, %v1607
    %v1609 = vmul.f32 %v1605, %v1607
    %v1610 = vld [vmem:[#allocation7 + $0xa] sm:$0x1]
    %v1611 = vperm.slane %v1610, 0
    %v1612 = vadd.f32 %v1608, %v1611
    %v1613 = vadd.f32 %v1609, %v1611
    %v1614 = vsel %vm738, %v1026, 0.0
    %v1615 = vsel %vm738, %v1172, 0.0
    %v1616 = vsel %vm738, %v1312, 0.0
    %v1617 = vsel %vm738, %v1452, 0.0
    %v1618 = vsel %vm738, %v1027, 0.0
    %v1619 = vsel %vm738, %v1173, 0.0
    %v1620 = vsel %vm738, %v1313, 0.0
    %v1621 = vsel %vm738, %v1453, 0.0
    %1622 = vst [vmem:[#allocation9] sm:$0xff] %v1614
    %1623 = vst [vmem:[#allocation9 + $0x8] sm:$0xff] %v1615
    %1624 = vst [vmem:[#allocation9 + $0x10] sm:$0xff] %v1616
    %1625 = vst [vmem:[#allocation9 + $0x18] sm:$0xff] %v1617
    %1626 = vst [vmem:[#allocation9 + $0x20] sm:$0xff] %v1618
    %1627 = vst [vmem:[#allocation9 + $0x28] sm:$0xff] %v1619
    %1628 = vst [vmem:[#allocation9 + $0x30] sm:$0xff] %v1620
    %1629 = vst [vmem:[#allocation9 + $0x38] sm:$0xff] %v1621
    %v1630 = vld [vmem:[%s4 + $0x40] sm:$0xf]
    %v1631 = vld [vmem:[%s4 + $0x44] sm:$0xf]
    %v1632 = vld [vmem:[%s4 + $0x48] sm:$0xf]
    %v1633 = vld [vmem:[%s4 + $0x4c] sm:$0xf]
    %v1634 = vpack.c.bf16 %v1613, %v1612
    %v1635 = vld [vmem:[#allocation7 + $0x4] sm:$0x1]
    %v1636 = vperm.slane %v1635, 0
    %v1641 = vunpack.c.l.b16 %v1630
    %v1642 = vunpack.c.l.b16 %v1631
    %v1643 = vunpack.c.l.b16 %v1632
    %v1644 = vunpack.c.l.b16 %v1633
    %v1645 = vpack.c.b16 %v1642, %v1641
    %v1646 = vpack.c.b16 %v1644, %v1643
    %v1650 = vsel %vm112, %v1634, 0
    %1652 = vmatpush.bf16.msra.mxu0 0
    %1653 = vmatpush.bf16.msra.mxu0 0
    %1654 = vmatpush.bf16.msra.mxu0 0
    %1655 = vmatpush.bf16.msra.mxu0 0
    %1656 = vmatpush.bf16.msra.mxu0 0
    %1657 = vmatpush.bf16.msra.mxu0 0
    %1658 = vmatpush.bf16.msra.mxu0 %v1646
    %1659 = vmatpush.bf16.msra.mxu0 %v1645
    %1660 = vmatmul.bf16.gmra.mxu0 %v1650
    %v1661 = vpop.f32.mrf.mxu0
    %v1662 = vadd.f32 %v1636, %v1661
    %v1663 = vpop.f32.mrf.mxu0
    %v1664 = vadd.f32 %v1636, %v1663
    %1665 = vdwg.mxu0
    %v1666 = vmax.f32 %v1662, 0.0
    %v1667 = vmax.f32 %v1664, 0.0
    %v1668 = vld [vmem:[%s4 + $0x50] sm:$0xf]
    %v1669 = vld [vmem:[%s4 + $0x54] sm:$0xf]
    %v1670 = vld [vmem:[%s4 + $0x58] sm:$0xf]
    %v1671 = vld [vmem:[%s4 + $0x5c] sm:$0xf]
    %v1672 = vld [vmem:[%s4 + $0x60] sm:$0xf]
    %v1673 = vld [vmem:[%s4 + $0x64] sm:$0xf]
    %v1674 = vld [vmem:[%s4 + $0x68] sm:$0xf]
    %v1675 = vld [vmem:[%s4 + $0x6c] sm:$0xf]
    %v1676 = vpack.c.bf16 %v1667, %v1666
    %v1677 = vld [vmem:[#allocation7 + $0x5] sm:$0x1]
    %v1678 = vperm.slane %v1677, 0
    %v1687 = vunpack.c.l.b16 %v1668
    %v1688 = vunpack.c.l.b16 %v1669
    %v1689 = vunpack.c.l.b16 %v1670
    %v1690 = vunpack.c.l.b16 %v1671
    %v1691 = vunpack.c.l.b16 %v1672
    %v1692 = vunpack.c.l.b16 %v1673
    %v1693 = vunpack.c.l.b16 %v1674
    %v1694 = vunpack.c.l.b16 %v1675
    %v1695 = vpack.c.b16 %v1688, %v1687
    %v1696 = vpack.c.b16 %v1690, %v1689
    %v1697 = vpack.c.b16 %v1692, %v1691
    %v1698 = vpack.c.b16 %v1694, %v1693
    %vm1703 = vcmask 523264
    %v1705 = vsel %vm1703, %v1676, 0
    %1707 = vmatpush.bf16.msra.mxu0 0
    %1708 = vmatpush.bf16.msra.mxu0 0
    %1709 = vmatpush.bf16.msra.mxu0 0
    %1710 = vmatpush.bf16.msra.mxu0 0
    %1711 = vmatpush.bf16.msra.mxu0 %v1698
    %1712 = vmatpush.bf16.msra.mxu0 %v1697
    %1713 = vmatpush.bf16.msra.mxu0 %v1696
    %1714 = vmatpush.bf16.msra.mxu0 %v1695
    %1715 = vmatmul.bf16.gmra.mxu0 %v1705
    %v1716 = vpop.f32.mrf.mxu0
    %v1717 = vadd.f32 %v1678, %v1716
    %v1718 = vpop.f32.mrf.mxu0
    %v1719 = vadd.f32 %v1678, %v1718
    %1720 = vdwg.mxu0
    %v1721 = vadd.f32 %v1612, %v1717
    %v1722 = vadd.f32 %v1613, %v1719
    %v1723 = vsel %vm112, %v1721, 0.0
    %1724 = vadd.xlane.f32.xlu0 %v1723
    %v1725 = vpop.xlane.xlu0 %1724
    %v1726 = vsel %vm112, %v1722, 0.0
    %1727 = vadd.xlane.f32.xlu0 %v1726
    %v1728 = vpop.xlane.xlu0 %1727
    %v1729 = vmul.f32 %v1725, %v794
    %v1730 = vmul.f32 %v1728, %v794
    %v1731 = vsub.f32 %v1721, %v1729
    %v1732 = vsub.f32 %v1722, %v1730
    %v1733 = vmul.f32 %v1731, %v1731
    %v1734 = vmul.f32 %v1732, %v1732
    %v1735 = vsel %vm112, %v1733, 0.0
    %1736 = vadd.xlane.f32.xlu0 %v1735
    %v1737 = vpop.xlane.xlu0 %1736
    %v1738 = vsel %vm112, %v1734, 0.0
    %1739 = vadd.xlane.f32.xlu0 %v1738
    %v1740 = vpop.xlane.xlu0 %1739
    %v1741 = vmul.f32 %v1737, %v794
    %v1742 = vmul.f32 %v1740, %v794
    %v1743 = vadd.f32 %v1741, 1e-05
    %v1744 = vadd.f32 %v1742, 1e-05
    %v1745 = vrsqrt.pop %v1743
    %v1746 = vmul.f32 %v1745, %v1743
    %v1747 = vmul.f32 %v1746, %v1745
    %v1748 = vmul.f32 0.5, %v1747
    %v1749 = vsub.f32 1.5, %v1748
    %v1750 = vmul.f32 %v1745, %v1749
    %vm1751 = vweird.f32 %v1743
    %vm1752 = vweird.f32 %v1745
    %vm1753 = vmor %vm1751, %vm1752
    %v1754 = vsel %vm1753, %v1745, %v1750
    %v1755 = vrsqrt.pop %v1744
    %v1756 = vmul.f32 %v1755, %v1744
    %v1757 = vmul.f32 %v1756, %v1755
    %v1758 = vmul.f32 0.5, %v1757
    %v1759 = vsub.f32 1.5, %v1758
    %v1760 = vmul.f32 %v1755, %v1759
    %vm1761 = vweird.f32 %v1744
    %vm1762 = vweird.f32 %v1755
    %vm1763 = vmor %vm1761, %vm1762
    %v1764 = vsel %vm1763, %v1755, %v1760
    %v1765 = vmul.f32 %v1731, %v1754
    %v1766 = vmul.f32 %v1732, %v1764
    %v1767 = vld [vmem:[#allocation7 + $0x8] sm:$0x1]
    %v1768 = vperm.slane %v1767, 0
    %v1769 = vmul.f32 %v1765, %v1768
    %v1770 = vmul.f32 %v1766, %v1768
    %v1771 = vld [vmem:[#allocation7 + $0xb] sm:$0x1]
    %v1772 = vperm.slane %v1771, 0
    %v1773 = vadd.f32 %v1769, %v1772
    %v1774 = vadd.f32 %v1770, %v1772
    %1775 = vst.msk [vmem:[#allocation8] sm:$0xff] %vm112, %v1773
    %1776 = vst.msk [vmem:[#allocation8 + $0x8] sm:$0xff] %vm112, %v1774
    // Predicated region
    $region38: #{_decoder_layer.1} parent=1 // pred_check
      _
    $region39: #{_decoder_layer.1} parent=1 // pred_check_branch
      %1778 = sbr.rel (0) target = $region41
    $region40: #{_decoder_layer.1} parent=1 // pred_region
      %1780 = vsyncadd [#allocation4], 0
      %s1781 = sshll.u32 [#allocation8], 4
      %s1782 = int_to_ptr.vmem [resolvable:$true] %s1781
      %s1783 = sshll.u32 %s6, 4
      %s1784 = int_to_ptr.hbm [resolvable:$true] %s1783
      %1789 = dma.vmem_to_hbm [thread:$0]  %s1782, 256, %s1784, [#allocation4], 128, 128, 8
    $region41: #{_decoder_layer.1} parent=1 // pred_fallthru
      _
    // Predicated region
    $region42: #{_decoder_layer.1} parent=1 // pred_check
      _
    $region43: #{_decoder_layer.1} parent=1 // pred_check_branch
      %1791 = sbr.rel (0) target = $region45
    $region44: #{_decoder_layer.1} parent=1 // pred_region
      %1793 = vsyncadd [#allocation10], 0
      %s1794 = sshll.u32 [#allocation9], 4
      %s1795 = int_to_ptr.vmem [resolvable:$true] %s1794
      %s1796 = sshll.u32 %s7, 4
      %s1797 = int_to_ptr.hbm [resolvable:$true] %s1796
      %1802 = dma.vmem_to_hbm [thread:$0]  %s1795, 1024, %s1797, [#allocation10], 128, 128, 8
    $region45: #{_decoder_layer.1} parent=1 // pred_fallthru
      _
    // Predicated region
    $region46: #{_decoder_layer.1} parent=1 // pred_check
      _
    $region47: #{_decoder_layer.1} parent=1 // pred_check_branch
      %1804 = sbr.rel (0) target = $region49
    $region48: #{_decoder_layer.1} parent=1 // pred_region
      %1806 = dma.done [#allocation4], 256
    $region49: #{_decoder_layer.1} parent=1 // pred_fallthru
      _
    // Predicated region
    $region50: #{_decoder_layer.1} parent=1 // pred_check
      _
    $region51: #{_decoder_layer.1} parent=1 // pred_check_branch
      %1808 = sbr.rel (0) target = $region53
    $region52: #{_decoder_layer.1} parent=1 // pred_region
      %1810 = dma.done [#allocation10], 1024
    $region53: #{_decoder_layer.1} parent=1 // pred_fallthru
      _
    %1811 = vsyncpa [#allocation3], 1
    %1812 = vsyncpa [#allocation6], 1
    %1813 = vsyncpa [#allocation4], 1
    %1814 = vsyncpa [#allocation10], 1

</llo_original>
